<compile_context>
chip_gen: v6e
topology: v6e:2x2x1
jax: 0.10.0
libtpu: 0.0.40
codegen_flags: <defaults>
</compile_context>

<pallas_src>
import functools

import jax
import jax.numpy as jnp
from jax.experimental import pallas as pl
from jax.experimental.pallas import tpu as pltpu


def _round_up(v, m):
    return (v + m - 1) // m * m


def _pad2(a, rows, cols):
    return jnp.pad(a, ((0, rows - a.shape[0]), (0, cols - a.shape[1])))


# ----------------------------------------------------------------------------
# Fused kernel: entire MLP forward for one row tile of the batch.
# Ref layout: [x_tile, (w, b) * num_hidden, w_final, b_final, out_tile]
#   w: bf16 [Cin_pad, Cout_pad]  (BN scale already folded in)
#   b: f32  [1, Cout_pad]        (bias * scale + shift, zero in padded lanes)
# ----------------------------------------------------------------------------
def _gate_mlp_kernel(*refs, num_hidden):
    o_ref = refs[-1]
    h = refs[0][...]                                   # [TILE_N, IN_PAD], f32
    idx = 1
    for _ in range(num_hidden):
        w = refs[idx][...]                             # bf16 MXU operand
        b = refs[idx + 1][...]                         # f32
        h = jnp.dot(h.astype(jnp.bfloat16), w,
                    preferred_element_type=jnp.float32) + b
        h = jnp.maximum(h, 0.0)                        # ReLU, f32 epilogue (v5e-friendly)
        # TODO(synk): training-mode dropout not implemented; eval-mode identity used.
        idx += 2
    w_f = refs[idx][...]
    b_f = refs[idx + 1][...]
    # Single lane-dense (multiple-of-128 last dim) store of the final result.
    o_ref[...] = jnp.dot(h.astype(jnp.bfloat16), w_f,
                         preferred_element_type=jnp.float32) + b_f


# ----------------------------------------------------------------------------
# Wrapper: fold BN, pad channels to 128 lanes, pad/tile the batch, launch once.
# ----------------------------------------------------------------------------
def gate_mlp_forward(params, x, *, apply_bn=True, bn_eps=1e-5, tile_n=256):
    """Eval-mode GateMLP forward as a single fused Pallas TPU kernel."""
    n, in_ch = x.shape
    num_hidden = len(params["lins"]) - 1
    out_ch = params["lins"][-1][0].shape[1]

    # ---- Row tiling: multiple of 8, >=2 grid steps when possible, pad N. ----
    tile_n = max(8, _round_up(int(tile_n), 8))
    tile_n = min(tile_n, _round_up(n, 8))
    if pl.cdiv(n, tile_n) < 2 and n > 8:
        tile_n = _round_up(pl.cdiv(n, 2), 8)      # ensure >=2 steps (v7x megacore)
    n_pad = _round_up(n, tile_n)
    grid = (n_pad // tile_n,)

    # ---- Channel padding to the 128-lane vreg width (lane-dense loads/stores). ----
    in_pad = _round_up(in_ch, 128)
    out_pad = _round_up(out_ch, 128)

    x_p = _pad2(x.astype(jnp.float32), n_pad, in_pad)

    # ---- Fold eval-mode BN (running stats) + bias into the weights, pad, cast bf16. ----
    folded = []
    for li in range(num_hidden):
        w, b = params["lins"][li]
        if apply_bn:
            gamma, beta, mean, var = params["bns"][li]
            scale = gamma * jax.lax.rsqrt(var + bn_eps)
            w = w * scale[None, :]
            b = b * scale + (beta - mean * scale)
        folded.append((w, b))
    folded.append(params["lins"][-1])

    operands = [x_p]
    param_shapes = []
    flops = 0
    param_bytes = 0
    max_width = max(in_pad, out_pad)
    for (w, b) in folded:
        cin_p = _round_up(w.shape[0], 128)
        cout_p = _round_up(w.shape[1], 128)
        max_width = max(max_width, cin_p, cout_p)
        w_p = _pad2(w, cin_p, cout_p).astype(jnp.bfloat16)
        b_p = _pad2(b.reshape(1, -1), 1, cout_p).astype(jnp.float32)
        operands += [w_p, b_p]
        param_shapes += [w_p.shape, b_p.shape]
        flops += 2 * n_pad * cin_p * cout_p
        param_bytes += w_p.size * 2 + b_p.size * 4

    # ---- VMEM budget: 2x pipelined x/out tiles + (1-2x) resident params + intermediates. ----
    tile_bytes = 2 * tile_n * (in_pad + out_pad) * 4
    act_bytes = 2 * tile_n * max_width * 4
    vmem_limit = int(1.5 * (tile_bytes + 2 * param_bytes + act_bytes)) + (4 << 20)
    vmem_limit = max(32 << 20, min(vmem_limit, 64 << 20))

    bytes_accessed = x_p.size * 4 + param_bytes + n_pad * out_pad * 4
    cost = pl.CostEstimate(flops=int(flops), transcendentals=0,
                           bytes_accessed=int(bytes_accessed))

    kernel = functools.partial(_gate_mlp_kernel, num_hidden=num_hidden)

    def _param_spec(shape, single_buffer):
        idx_map = lambda i: (0, 0)
        if single_buffer and hasattr(pl, "Buffered"):
            try:
                # Grid-invariant block: single-buffer to halve its VMEM footprint.
                return pl.BlockSpec(shape, idx_map, pipeline_mode=pl.Buffered(1))
            except TypeError:
                pass
        return pl.BlockSpec(shape, idx_map)

    def _launch(single_buffer_params):
        in_specs = [pl.BlockSpec((tile_n, in_pad), lambda i: (i, 0))]
        in_specs += [_param_spec(s, single_buffer_params) for s in param_shapes]
        return pl.pallas_call(
            kernel,
            out_shape=jax.ShapeDtypeStruct((n_pad, out_pad), jnp.float32),
            grid=grid,
            in_specs=in_specs,
            out_specs=pl.BlockSpec((tile_n, out_pad), lambda i: (i, 0)),
            compiler_params=pltpu.CompilerParams(
                dimension_semantics=("parallel",),
                vmem_limit_bytes=vmem_limit),
            cost_estimate=cost,
        )(*operands)

    try:
        out_p = _launch(True)
    except Exception:
        # Fallback: some toolchains reject single-buffered (Buffered(1)) param blocks.
        out_p = _launch(False)

    # Slice away batch / channel padding outside the kernel.
    return out_p[:n, :out_ch]


# ----------------------------------------------------------------------------
# Parameter init (mirrors torch.nn.Linear / BatchNorm1d; weights stored [in, out]).
# ----------------------------------------------------------------------------
def init_gate_mlp_params(key, in_channels, hidden_channels, out_channels, num_layers):
    def linear(k, fan_in, fan_out):
        lim = 1.0 / (fan_in ** 0.5)
        kw, kb = jax.random.split(k)
        w = jax.random.uniform(kw, (fan_in, fan_out), jnp.float32, -lim, lim)
        b = jax.random.uniform(kb, (fan_out,), jnp.float32, -lim, lim)
        return w, b

    dims = [in_channels] + [hidden_channels] * (num_layers - 1) + [out_channels]
    keys = jax.random.split(key, 3 * num_layers)

    lins, bns = [], []
    for li in range(num_layers):
        lins.append(linear(keys[3 * li], dims[li], dims[li + 1]))
        if li < num_layers - 1:
            c = dims[li + 1]
            gamma = 1.0 + 0.1 * jax.random.normal(keys[3 * li + 1], (c,), jnp.float32)
            beta = 0.1 * jax.random.normal(keys[3 * li + 2], (c,), jnp.float32)
            mean = 0.05 * jax.random.normal(jax.random.fold_in(keys[3 * li + 1], 7),
                                            (c,), jnp.float32)
            var = 1.0 + 0.1 * jnp.abs(
                jax.random.normal(jax.random.fold_in(keys[3 * li + 2], 11),
                                  (c,), jnp.float32))
            bns.append((gamma, beta, mean, var))
    return {"lins": lins, "bns": bns}


# ----------------------------------------------------------------------------
# Pure-JAX references for correctness checks.
# ----------------------------------------------------------------------------
def _ref_forward_f32(params, x, apply_bn=True, eps=1e-5):
    # Exact eval-mode module math in f32.
    h = x
    for i in range(len(params["lins"]) - 1):
        w, b = params["lins"][i]
        h = h @ w + b
        if apply_bn:
            g, be, m, v = params["bns"][i]
            h = (h - m) / jnp.sqrt(v + eps) * g + be
        h = jnp.maximum(h, 0.0)
        # dropout: eval mode -> identity
    w, b = params["lins"][-1]
    return h @ w + b


def _ref_forward_bf16(params, x, apply_bn=True, eps=1e-5):
    # Same folded-weight / bf16-operand math as the kernel (tight check).
    h = x.astype(jnp.float32)
    for i in range(len(params["lins"]) - 1):
        w, b = params["lins"][i]
        if apply_bn:
            g, be, m, v = params["bns"][i]
            s = g * jax.lax.rsqrt(v + eps)
            w = w * s[None, :]
            b = b * s + (be - m * s)
        h = jnp.dot(h.astype(jnp.bfloat16), w.astype(jnp.bfloat16),
                    preferred_element_type=jnp.float32) + b
        h = jnp.maximum(h, 0.0)
    w, b = params["lins"][-1]
    return jnp.dot(h.astype(jnp.bfloat16), w.astype(jnp.bfloat16),
                   preferred_element_type=jnp.float32) + b


# ----------------------------------------------------------------------------
if __name__ == "__main__":
    N = 128           # batch of rows
    IN_CH = 16
    HIDDEN = 32
    OUT_CH = 8
    NUM_LAYERS = 3    # 2 (Linear+BN+ReLU) blocks + final Linear; dropout irrelevant in eval

    key = jax.random.PRNGKey(0)
    k_x, k_p = jax.random.split(key)

    x = jax.random.normal(k_x, (N, IN_CH), jnp.float32)
    params = init_gate_mlp_params(k_p, IN_CH, HIDDEN, OUT_CH, NUM_LAYERS)

    out = gate_mlp_forward(params, x, apply_bn=True, tile_n=256)
    out = jax.block_until_ready(out)
    assert out.shape == (N, OUT_CH)

    # Tight check vs a reference doing the same bf16-weight math.
    ref_bf16 = _ref_forward_bf16(params, x, apply_bn=True)
    assert jnp.allclose(out, ref_bf16, atol=1e-2, rtol=1e-2), "mismatch vs bf16 reference"

    # Loose check vs the exact f32 eval-mode module math (bf16 weight tolerance).
    ref_f32 = _ref_forward_f32(params, x, apply_bn=True)
    assert jnp.allclose(out, ref_f32, atol=6e-2, rtol=6e-2), "mismatch vs f32 reference"

    print("KERNEL_OK")
</pallas_src>

<mosaic_0001>
module attributes {stable_mosaic.version = 11 : i64} {
  func.func @_gate_mlp_kernel(%arg0: i32, %arg1: memref<64x128xf32, #tpu.memory_space<vmem>>, %arg2: memref<128x128xbf16, #tpu.memory_space<vmem>>, %arg3: memref<1x128xf32, #tpu.memory_space<vmem>>, %arg4: memref<128x128xbf16, #tpu.memory_space<vmem>>, %arg5: memref<1x128xf32, #tpu.memory_space<vmem>>, %arg6: memref<128x128xbf16, #tpu.memory_space<vmem>>, %arg7: memref<1x128xf32, #tpu.memory_space<vmem>>, %arg8: memref<64x128xf32, #tpu.memory_space<vmem>>) attributes {dimension_semantics = [#tpu.dimension_semantics<parallel>], iteration_bounds = array<i64: 2>, scalar_prefetch = 0 : i64, scratch_operands = 0 : i64, tpu.core_type = #tpu.core_type<tc>, window_params = [{transform_indices = @transform_0, window_bounds = array<i64: 64, 128>}, {pipeline_mode = #tpu.pipeline_mode<synchronous>, transform_indices = @transform_1, window_bounds = array<i64: 128, 128>}, {pipeline_mode = #tpu.pipeline_mode<synchronous>, transform_indices = @transform_2, window_bounds = array<i64: 1, 128>}, {pipeline_mode = #tpu.pipeline_mode<synchronous>, transform_indices = @transform_3, window_bounds = array<i64: 128, 128>}, {pipeline_mode = #tpu.pipeline_mode<synchronous>, transform_indices = @transform_4, window_bounds = array<i64: 1, 128>}, {pipeline_mode = #tpu.pipeline_mode<synchronous>, transform_indices = @transform_5, window_bounds = array<i64: 128, 128>}, {pipeline_mode = #tpu.pipeline_mode<synchronous>, transform_indices = @transform_6, window_bounds = array<i64: 1, 128>}, {transform_indices = @transform_7, window_bounds = array<i64: 64, 128>}]} {
    %c0 = arith.constant 0 : index
    %c0_0 = arith.constant 0 : index
    %0 = vector.load %arg1[%c0, %c0_0] : memref<64x128xf32, #tpu.memory_space<vmem>>, vector<64x128xf32>
    %c0_1 = arith.constant 0 : index
    %c0_2 = arith.constant 0 : index
    %1 = vector.load %arg2[%c0_1, %c0_2] : memref<128x128xbf16, #tpu.memory_space<vmem>>, vector<128x128xbf16>
    %c0_3 = arith.constant 0 : index
    %c0_4 = arith.constant 0 : index
    %2 = vector.load %arg3[%c0_3, %c0_4] : memref<1x128xf32, #tpu.memory_space<vmem>>, vector<1x128xf32>
    %3 = arith.truncf %0 : vector<64x128xf32> to vector<64x128xbf16>
    %cst = arith.constant dense<0.000000e+00> : vector<64x128xf32>
    %4 = tpu.matmul %3, %1, %cst {dimension_numbers = #tpu.dot_dimension_numbers<[1], [0], [0], [1], [0, 0, 1, 1], [], []>} : vector<64x128xbf16>, vector<128x128xbf16>, vector<64x128xf32> -> vector<64x128xf32>
    %5 = vector.broadcast %2 : vector<1x128xf32> to vector<64x128xf32>
    %6 = arith.addf %4, %5 : vector<64x128xf32>
    %cst_5 = arith.constant 0.000000e+00 : f32
    %7 = vector.broadcast %cst_5 : f32 to vector<64x128xf32>
    %8 = arith.maximumf %6, %7 : vector<64x128xf32>
    %c0_6 = arith.constant 0 : index
    %c0_7 = arith.constant 0 : index
    %9 = vector.load %arg4[%c0_6, %c0_7] : memref<128x128xbf16, #tpu.memory_space<vmem>>, vector<128x128xbf16>
    %c0_8 = arith.constant 0 : index
    %c0_9 = arith.constant 0 : index
    %10 = vector.load %arg5[%c0_8, %c0_9] : memref<1x128xf32, #tpu.memory_space<vmem>>, vector<1x128xf32>
    %11 = arith.truncf %8 : vector<64x128xf32> to vector<64x128xbf16>
    %cst_10 = arith.constant dense<0.000000e+00> : vector<64x128xf32>
    %12 = tpu.matmul %11, %9, %cst_10 {dimension_numbers = #tpu.dot_dimension_numbers<[1], [0], [0], [1], [0, 0, 1, 1], [], []>} : vector<64x128xbf16>, vector<128x128xbf16>, vector<64x128xf32> -> vector<64x128xf32>
    %13 = vector.broadcast %10 : vector<1x128xf32> to vector<64x128xf32>
    %14 = arith.addf %12, %13 : vector<64x128xf32>
    %cst_11 = arith.constant 0.000000e+00 : f32
    %15 = vector.broadcast %cst_11 : f32 to vector<64x128xf32>
    %16 = arith.maximumf %14, %15 : vector<64x128xf32>
    %c0_12 = arith.constant 0 : index
    %c0_13 = arith.constant 0 : index
    %17 = vector.load %arg6[%c0_12, %c0_13] : memref<128x128xbf16, #tpu.memory_space<vmem>>, vector<128x128xbf16>
    %c0_14 = arith.constant 0 : index
    %c0_15 = arith.constant 0 : index
    %18 = vector.load %arg7[%c0_14, %c0_15] : memref<1x128xf32, #tpu.memory_space<vmem>>, vector<1x128xf32>
    %19 = arith.truncf %16 : vector<64x128xf32> to vector<64x128xbf16>
    %cst_16 = arith.constant dense<0.000000e+00> : vector<64x128xf32>
    %20 = tpu.matmul %19, %17, %cst_16 {dimension_numbers = #tpu.dot_dimension_numbers<[1], [0], [0], [1], [0, 0, 1, 1], [], []>} : vector<64x128xbf16>, vector<128x128xbf16>, vector<64x128xf32> -> vector<64x128xf32>
    %21 = vector.broadcast %18 : vector<1x128xf32> to vector<64x128xf32>
    %22 = arith.addf %20, %21 : vector<64x128xf32>
    %c0_17 = arith.constant 0 : index
    %c0_18 = arith.constant 0 : index
    %23 = vector.load %arg8[%c0_17, %c0_18] : memref<64x128xf32, #tpu.memory_space<vmem>>, vector<64x128xf32>
    tpu.vector_store %arg8[%c0_17, %c0_18], %22 {strides = array<i32>} : memref<64x128xf32, #tpu.memory_space<vmem>>, vector<64x128xf32>,
    return
  }
  func.func @transform_0(%arg0: i32) -> (i32, i32) {
    %c0_i32 = arith.constant 0 : i32
    %c0_i32_0 = arith.constant 0 : i32
    return %arg0, %c0_i32 : i32, i32
  }
  func.func @transform_1(%arg0: i32) -> (i32, i32) {
    %c0_i32 = arith.constant 0 : i32
    %c0_i32_0 = arith.constant 0 : i32
    %c0_i32_1 = arith.constant 0 : i32
    return %c0_i32, %c0_i32_0 : i32, i32
  }
  func.func @transform_2(%arg0: i32) -> (i32, i32) {
    %c0_i32 = arith.constant 0 : i32
    %c0_i32_0 = arith.constant 0 : i32
    %c0_i32_1 = arith.constant 0 : i32
    return %c0_i32, %c0_i32_0 : i32, i32
  }
  func.func @transform_3(%arg0: i32) -> (i32, i32) {
    %c0_i32 = arith.constant 0 : i32
    %c0_i32_0 = arith.constant 0 : i32
    %c0_i32_1 = arith.constant 0 : i32
    return %c0_i32, %c0_i32_0 : i32, i32
  }
  func.func @transform_4(%arg0: i32) -> (i32, i32) {
    %c0_i32 = arith.constant 0 : i32
    %c0_i32_0 = arith.constant 0 : i32
    %c0_i32_1 = arith.constant 0 : i32
    return %c0_i32, %c0_i32_0 : i32, i32
  }
  func.func @transform_5(%arg0: i32) -> (i32, i32) {
    %c0_i32 = arith.constant 0 : i32
    %c0_i32_0 = arith.constant 0 : i32
    %c0_i32_1 = arith.constant 0 : i32
    return %c0_i32, %c0_i32_0 : i32, i32
  }
  func.func @transform_6(%arg0: i32) -> (i32, i32) {
    %c0_i32 = arith.constant 0 : i32
    %c0_i32_0 = arith.constant 0 : i32
    %c0_i32_1 = arith.constant 0 : i32
    return %c0_i32, %c0_i32_0 : i32, i32
  }
  func.func @transform_7(%arg0: i32) -> (i32, i32) {
    %c0_i32 = arith.constant 0 : i32
    %c0_i32_0 = arith.constant 0 : i32
    return %arg0, %c0_i32 : i32, i32
  }
}

module attributes {stable_mosaic.version = 11 : i64} {
  func.func @_gate_mlp_kernel(%arg0: i32, %arg1: memref<64x128xf32, #tpu.memory_space<vmem>>, %arg2: memref<128x128xbf16, #tpu.memory_space<vmem>>, %arg3: memref<1x128xf32, #tpu.memory_space<vmem>>, %arg4: memref<128x128xbf16, #tpu.memory_space<vmem>>, %arg5: memref<1x128xf32, #tpu.memory_space<vmem>>, %arg6: memref<128x128xbf16, #tpu.memory_space<vmem>>, %arg7: memref<1x128xf32, #tpu.memory_space<vmem>>, %arg8: memref<64x128xf32, #tpu.memory_space<vmem>>) attributes {dimension_semantics = [#tpu.dimension_semantics<parallel>], iteration_bounds = array<i64: 2>, scalar_prefetch = 0 : i64, scratch_operands = 0 : i64, tpu.core_type = #tpu.core_type<tc>, window_params = [{transform_indices = @transform_0, window_bounds = array<i64: 64, 128>}, {pipeline_mode = #tpu.pipeline_mode<synchronous>, transform_indices = @transform_1, window_bounds = array<i64: 128, 128>}, {pipeline_mode = #tpu.pipeline_mode<synchronous>, transform_indices = @transform_2, window_bounds = array<i64: 1, 128>}, {pipeline_mode = #tpu.pipeline_mode<synchronous>, transform_indices = @transform_3, window_bounds = array<i64: 128, 128>}, {pipeline_mode = #tpu.pipeline_mode<synchronous>, transform_indices = @transform_4, window_bounds = array<i64: 1, 128>}, {pipeline_mode = #tpu.pipeline_mode<synchronous>, transform_indices = @transform_5, window_bounds = array<i64: 128, 128>}, {pipeline_mode = #tpu.pipeline_mode<synchronous>, transform_indices = @transform_6, window_bounds = array<i64: 1, 128>}, {transform_indices = @transform_7, window_bounds = array<i64: 64, 128>}]} {
    %c0 = arith.constant 0 : index
    %c0_0 = arith.constant 0 : index
    %0 = vector.load %arg1[%c0, %c0_0] : memref<64x128xf32, #tpu.memory_space<vmem>>, vector<64x128xf32>
    %c0_1 = arith.constant 0 : index
    %c0_2 = arith.constant 0 : index
    %1 = vector.load %arg2[%c0_1, %c0_2] : memref<128x128xbf16, #tpu.memory_space<vmem>>, vector<128x128xbf16>
    %c0_3 = arith.constant 0 : index
    %c0_4 = arith.constant 0 : index
    %2 = vector.load %arg3[%c0_3, %c0_4] : memref<1x128xf32, #tpu.memory_space<vmem>>, vector<1x128xf32>
    %3 = arith.truncf %0 : vector<64x128xf32> to vector<64x128xbf16>
    %cst = arith.constant dense<0.000000e+00> : vector<64x128xf32>
    %4 = tpu.matmul %3, %1, %cst {dimension_numbers = #tpu.dot_dimension_numbers<[1], [0], [0], [1], [0, 0, 1, 1], [], []>} : vector<64x128xbf16>, vector<128x128xbf16>, vector<64x128xf32> -> vector<64x128xf32>
    %5 = vector.broadcast %2 : vector<1x128xf32> to vector<64x128xf32>
    %6 = arith.addf %4, %5 : vector<64x128xf32>
    %cst_5 = arith.constant 0.000000e+00 : f32
    %7 = vector.broadcast %cst_5 : f32 to vector<64x128xf32>
    %8 = arith.maximumf %6, %7 : vector<64x128xf32>
    %c0_6 = arith.constant 0 : index
    %c0_7 = arith.constant 0 : index
    %9 = vector.load %arg4[%c0_6, %c0_7] : memref<128x128xbf16, #tpu.memory_space<vmem>>, vector<128x128xbf16>
    %c0_8 = arith.constant 0 : index
    %c0_9 = arith.constant 0 : index
    %10 = vector.load %arg5[%c0_8, %c0_9] : memref<1x128xf32, #tpu.memory_space<vmem>>, vector<1x128xf32>
    %11 = arith.truncf %8 : vector<64x128xf32> to vector<64x128xbf16>
    %cst_10 = arith.constant dense<0.000000e+00> : vector<64x128xf32>
    %12 = tpu.matmul %11, %9, %cst_10 {dimension_numbers = #tpu.dot_dimension_numbers<[1], [0], [0], [1], [0, 0, 1, 1], [], []>} : vector<64x128xbf16>, vector<128x128xbf16>, vector<64x128xf32> -> vector<64x128xf32>
    %13 = vector.broadcast %10 : vector<1x128xf32> to vector<64x128xf32>
    %14 = arith.addf %12, %13 : vector<64x128xf32>
    %cst_11 = arith.constant 0.000000e+00 : f32
    %15 = vector.broadcast %cst_11 : f32 to vector<64x128xf32>
    %16 = arith.maximumf %14, %15 : vector<64x128xf32>
    %c0_12 = arith.constant 0 : index
    %c0_13 = arith.constant 0 : index
    %17 = vector.load %arg6[%c0_12, %c0_13] : memref<128x128xbf16, #tpu.memory_space<vmem>>, vector<128x128xbf16>
    %c0_14 = arith.constant 0 : index
    %c0_15 = arith.constant 0 : index
    %18 = vector.load %arg7[%c0_14, %c0_15] : memref<1x128xf32, #tpu.memory_space<vmem>>, vector<1x128xf32>
    %19 = arith.truncf %16 : vector<64x128xf32> to vector<64x128xbf16>
    %cst_16 = arith.constant dense<0.000000e+00> : vector<64x128xf32>
    %20 = tpu.matmul %19, %17, %cst_16 {dimension_numbers = #tpu.dot_dimension_numbers<[1], [0], [0], [1], [0, 0, 1, 1], [], []>} : vector<64x128xbf16>, vector<128x128xbf16>, vector<64x128xf32> -> vector<64x128xf32>
    %21 = vector.broadcast %18 : vector<1x128xf32> to vector<64x128xf32>
    %22 = arith.addf %20, %21 : vector<64x128xf32>
    %c0_17 = arith.constant 0 : index
    %c0_18 = arith.constant 0 : index
    %23 = vector.load %arg8[%c0_17, %c0_18] : memref<64x128xf32, #tpu.memory_space<vmem>>, vector<64x128xf32>
    tpu.vector_store %arg8[%c0_17, %c0_18], %22 {strides = array<i32>} : memref<64x128xf32, #tpu.memory_space<vmem>>, vector<64x128xf32>,
    return
  }
  func.func @transform_0(%arg0: i32) -> (i32, i32) {
    %c0_i32 = arith.constant 0 : i32
    %c0_i32_0 = arith.constant 0 : i32
    return %arg0, %c0_i32 : i32, i32
  }
  func.func @transform_1(%arg0: i32) -> (i32, i32) {
    %c0_i32 = arith.constant 0 : i32
    %c0_i32_0 = arith.constant 0 : i32
    %c0_i32_1 = arith.constant 0 : i32
    return %c0_i32, %c0_i32_0 : i32, i32
  }
  func.func @transform_2(%arg0: i32) -> (i32, i32) {
    %c0_i32 = arith.constant 0 : i32
    %c0_i32_0 = arith.constant 0 : i32
    %c0_i32_1 = arith.constant 0 : i32
    return %c0_i32, %c0_i32_0 : i32, i32
  }
  func.func @transform_3(%arg0: i32) -> (i32, i32) {
    %c0_i32 = arith.constant 0 : i32
    %c0_i32_0 = arith.constant 0 : i32
    %c0_i32_1 = arith.constant 0 : i32
    return %c0_i32, %c0_i32_0 : i32, i32
  }
  func.func @transform_4(%arg0: i32) -> (i32, i32) {
    %c0_i32 = arith.constant 0 : i32
    %c0_i32_0 = arith.constant 0 : i32
    %c0_i32_1 = arith.constant 0 : i32
    return %c0_i32, %c0_i32_0 : i32, i32
  }
  func.func @transform_5(%arg0: i32) -> (i32, i32) {
    %c0_i32 = arith.constant 0 : i32
    %c0_i32_0 = arith.constant 0 : i32
    %c0_i32_1 = arith.constant 0 : i32
    return %c0_i32, %c0_i32_0 : i32, i32
  }
  func.func @transform_6(%arg0: i32) -> (i32, i32) {
    %c0_i32 = arith.constant 0 : i32
    %c0_i32_0 = arith.constant 0 : i32
    %c0_i32_1 = arith.constant 0 : i32
    return %c0_i32, %c0_i32_0 : i32, i32
  }
  func.func @transform_7(%arg0: i32) -> (i32, i32) {
    %c0_i32 = arith.constant 0 : i32
    %c0_i32_0 = arith.constant 0 : i32
    return %arg0, %c0_i32 : i32, i32
  }
}

</mosaic_0001>

<llo_original>
// kernel: tpu_custom_call.1
$region0: #{tpu_custom_call.1}
  #allocation0 [shape = 'u32[]', space=smem, size = 0x4, offset = 0x4, fixed_abs, tag = 'smem constant byte address 0x4 - core index']
  #allocation1 [shape = 'u32[144,128]{1,0:T(1,128)}', space=vmem, size = 0x12000, scoped, tag = 'internal scratch']
  %s0 = inlined_call_operand.hbm [shape: f32[128,128], index: 0, kind: input, shape index: {}]
  %s1 = inlined_call_operand.hbm [shape: bf16[128,128], index: 1, kind: input, shape index: {}]
  %s2 = inlined_call_operand.vmem [shape: f32[1,128], index: 2, kind: input, shape index: {}]
  %s3 = inlined_call_operand.hbm [shape: bf16[128,128], index: 3, kind: input, shape index: {}]
  %s4 = inlined_call_operand.vmem [shape: f32[1,128], index: 4, kind: input, shape index: {}]
  %s5 = inlined_call_operand.hbm [shape: bf16[128,128], index: 5, kind: input, shape index: {}]
  %s6 = inlined_call_operand.vmem [shape: f32[1,128], index: 6, kind: input, shape index: {}]
  %s7 = inlined_call_operand.hbm [shape: f32[128,128], index: 7, kind: output, shape index: {}]
  %s8 = sld [smem:[#allocation0]]
  $region77: #{tpu_custom_call.1} parent=0
    _
  %s10 = ssub.s32 1, %s8
  %s11 = scalar_select 0, %s10, %s8
  $region1: #{tpu_custom_call.1} parent=0
    #allocation2 [shape = 'u8[65536]{0}', space=vmem, size = 0x10000, scoped, tag = 'input window, operand 0']
    #allocation3 [shape = 's32[2]{0}', space=sflag, size = 0x8, scoped, tag = 'scoped memory for tpu_custom_call.1']
    #allocation4 [shape = 's32[2]{0}', space=sflag, size = 0x8, scoped, tag = 'scoped memory for tpu_custom_call.1']
    #allocation5 [shape = 'u8[32768]{0}', space=vmem, size = 0x8000, scoped, tag = 'input window, operand 1, single buffered']
    #allocation6 [shape = 's32[1]{0}', space=sflag, size = 0x4, scoped, tag = 'scoped memory for tpu_custom_call.1']
    #allocation7 [shape = 'u8[32768]{0}', space=vmem, size = 0x8000, scoped, tag = 'input window, operand 3, single buffered']
    #allocation8 [shape = 'u8[32768]{0}', space=vmem, size = 0x8000, scoped, tag = 'input window, operand 5, single buffered']
    #allocation9 [shape = 's32[1]{0}', space=sflag, size = 0x4, scoped, tag = 'scoped memory for tpu_custom_call.1']
    #allocation10 [shape = 'u8[65536]{0}', space=vmem, size = 0x10000, scoped, tag = 'output window, operand 0']
    %12 = vsyncpa [#allocation3], 0
    %s13 = scalar_lea.sflag [#allocation3], 1
    %14 = vsyncpa %s13, 0
    %15 = vsyncpa [#allocation6], 0
    %16 = vsyncpa [#allocation9], 0
    %17 = vsyncpa [#allocation4], 0
    %s18 = scalar_lea.sflag [#allocation4], 1
    %19 = vsyncpa %s18, 0
    loop: start=0, step=1, limit=4
    $region2: #{tpu_custom_call.1} parent=1 // loop_pre_header
      _
    $region3: #{tpu_custom_call.1} parent=1 // loop_header
      %s21 = sphi 0, %s25
      %p22 = scmp.ge.s32.totalorder %s21, 4
      %s31 = sphi 0, %s33
      %s34 = sphi 0, %s31
      %s35 = sphi 0, %s34
      %s51 = sphi 0, %s35
      %s55 = sphi 0, %s55
      %s57 = sphi 0, %s55
      %s58 = sphi 0, %s57
      %s72 = sphi 0, %s58
      %s76 = sphi 0, %s76
      %s78 = sphi 0, %s76
      %s79 = sphi 0, %s78
      %s93 = sphi 0, %s79
      %s97 = sphi 0, %s97
      %s99 = sphi 0, %s97
      %s100 = sphi 0, %s99
      %s114 = sphi 0, %s100
      %s118 = sphi 0, %s118
      %s120 = sphi 0, %s118
      %s121 = sphi 0, %s120
      %s135 = sphi 0, %s121
      %s139 = sphi 0, %s139
      %s141 = sphi 0, %s139
      %s142 = sphi 0, %s141
      %s156 = sphi 0, %s142
      %s160 = sphi 0, %s160
      %s162 = sphi 0, %s160
      %s163 = sphi 0, %s162
      %s177 = sphi 0, %s163
      %s183 = sphi 0, %s185
      %s186 = sphi 0, %s183
      %s187 = sphi 0, %s186
      %s203 = sphi 0, %s187
    $region4: #{tpu_custom_call.1} parent=1 // loop_header_branch
      %24 = sbr.rel (%p22) target = $region8
    $region5: #{tpu_custom_call.1} parent=1 // loop_body
      %s26 = ssub.s32 %s21, 1
      %s27 = ssub.s32 %s21, 2
      %s28 = sadd.s32 %s21, 1
      %s29 = ssub.s32 %s21, %s28
      %p30 = scmp.eq.s32.totalorder %s29, 0
      %s32 = sadd.s32 %s31, 1
      %s33 = scalar_select %p30, %s31, %s32
      %p36 = pneg %p30
      %p37 = scmp.eq.s32.totalorder %s21, 1
      %p38 = por %p36, %p37
      %p39 = scmp.ne.s32.totalorder %s31, %s34
      %p40 = scmp.eq.s32.totalorder %s21, 0
      %p41 = por %p39, %p40
      %p42 = scmp.ne.s32.totalorder %s31, %s34
      %p43 = scmp.eq.s32.totalorder %s26, 1
      %p44 = por %p42, %p43
      %p45 = scmp.ne.s32.totalorder %s34, %s35
      %p46 = scmp.eq.s32.totalorder %s26, 0
      %p47 = por %p45, %p46
      %p48 = scmp.ne.s32.totalorder %s34, %s35
      %p49 = scmp.eq.s32.totalorder %s27, 1
      %p50 = por %p48, %p49
      %p52 = scmp.ne.s32.totalorder %s35, %s51
      %p53 = scmp.eq.s32.totalorder %s27, 0
      %p54 = por %p52, %p53
      %s56 = sadd.s32 %s55, 1
      %p59 = scmp.eq.s32.totalorder %s21, 1
      %p60 = scmp.ne.s32.totalorder %s55, %s57
      %p61 = scmp.eq.s32.totalorder %s21, 0
      %p62 = por %p60, %p61
      %p63 = scmp.ne.s32.totalorder %s55, %s57
      %p64 = scmp.eq.s32.totalorder %s26, 1
      %p65 = por %p63, %p64
      %p66 = scmp.ne.s32.totalorder %s57, %s58
      %p67 = scmp.eq.s32.totalorder %s26, 0
      %p68 = por %p66, %p67
      %p69 = scmp.ne.s32.totalorder %s57, %s58
      %p70 = scmp.eq.s32.totalorder %s27, 1
      %p71 = por %p69, %p70
      %p73 = scmp.ne.s32.totalorder %s58, %s72
      %p74 = scmp.eq.s32.totalorder %s27, 0
      %p75 = por %p73, %p74
      %s77 = sadd.s32 %s76, 1
      %p80 = scmp.eq.s32.totalorder %s21, 1
      %p81 = scmp.ne.s32.totalorder %s76, %s78
      %p82 = scmp.eq.s32.totalorder %s21, 0
      %p83 = por %p81, %p82
      %p84 = scmp.ne.s32.totalorder %s76, %s78
      %p85 = scmp.eq.s32.totalorder %s26, 1
      %p86 = por %p84, %p85
      %p87 = scmp.ne.s32.totalorder %s78, %s79
      %p88 = scmp.eq.s32.totalorder %s26, 0
      %p89 = por %p87, %p88
      %p90 = scmp.ne.s32.totalorder %s78, %s79
      %p91 = scmp.eq.s32.totalorder %s27, 1
      %p92 = por %p90, %p91
      %p94 = scmp.ne.s32.totalorder %s79, %s93
      %p95 = scmp.eq.s32.totalorder %s27, 0
      %p96 = por %p94, %p95
      %s98 = sadd.s32 %s97, 1
      %p101 = scmp.eq.s32.totalorder %s21, 1
      %p102 = scmp.ne.s32.totalorder %s97, %s99
      %p103 = scmp.eq.s32.totalorder %s21, 0
      %p104 = por %p102, %p103
      %p105 = scmp.ne.s32.totalorder %s97, %s99
      %p106 = scmp.eq.s32.totalorder %s26, 1
      %p107 = por %p105, %p106
      %p108 = scmp.ne.s32.totalorder %s99, %s100
      %p109 = scmp.eq.s32.totalorder %s26, 0
      %p110 = por %p108, %p109
      %p111 = scmp.ne.s32.totalorder %s99, %s100
      %p112 = scmp.eq.s32.totalorder %s27, 1
      %p113 = por %p111, %p112
      %p115 = scmp.ne.s32.totalorder %s100, %s114
      %p116 = scmp.eq.s32.totalorder %s27, 0
      %p117 = por %p115, %p116
      %s119 = sadd.s32 %s118, 1
      %p122 = scmp.eq.s32.totalorder %s21, 1
      %p123 = scmp.ne.s32.totalorder %s118, %s120
      %p124 = scmp.eq.s32.totalorder %s21, 0
      %p125 = por %p123, %p124
      %p126 = scmp.ne.s32.totalorder %s118, %s120
      %p127 = scmp.eq.s32.totalorder %s26, 1
      %p128 = por %p126, %p127
      %p129 = scmp.ne.s32.totalorder %s120, %s121
      %p130 = scmp.eq.s32.totalorder %s26, 0
      %p131 = por %p129, %p130
      %p132 = scmp.ne.s32.totalorder %s120, %s121
      %p133 = scmp.eq.s32.totalorder %s27, 1
      %p134 = por %p132, %p133
      %p136 = scmp.ne.s32.totalorder %s121, %s135
      %p137 = scmp.eq.s32.totalorder %s27, 0
      %p138 = por %p136, %p137
      %s140 = sadd.s32 %s139, 1
      %p143 = scmp.eq.s32.totalorder %s21, 1
      %p144 = scmp.ne.s32.totalorder %s139, %s141
      %p145 = scmp.eq.s32.totalorder %s21, 0
      %p146 = por %p144, %p145
      %p147 = scmp.ne.s32.totalorder %s139, %s141
      %p148 = scmp.eq.s32.totalorder %s26, 1
      %p149 = por %p147, %p148
      %p150 = scmp.ne.s32.totalorder %s141, %s142
      %p151 = scmp.eq.s32.totalorder %s26, 0
      %p152 = por %p150, %p151
      %p153 = scmp.ne.s32.totalorder %s141, %s142
      %p154 = scmp.eq.s32.totalorder %s27, 1
      %p155 = por %p153, %p154
      %p157 = scmp.ne.s32.totalorder %s142, %s156
      %p158 = scmp.eq.s32.totalorder %s27, 0
      %p159 = por %p157, %p158
      %s161 = sadd.s32 %s160, 1
      %p164 = scmp.eq.s32.totalorder %s21, 1
      %p165 = scmp.ne.s32.totalorder %s160, %s162
      %p166 = scmp.eq.s32.totalorder %s21, 0
      %p167 = por %p165, %p166
      %p168 = scmp.ne.s32.totalorder %s160, %s162
      %p169 = scmp.eq.s32.totalorder %s26, 1
      %p170 = por %p168, %p169
      %p171 = scmp.ne.s32.totalorder %s162, %s163
      %p172 = scmp.eq.s32.totalorder %s26, 0
      %p173 = por %p171, %p172
      %p174 = scmp.ne.s32.totalorder %s162, %s163
      %p175 = scmp.eq.s32.totalorder %s27, 1
      %p176 = por %p174, %p175
      %p178 = scmp.ne.s32.totalorder %s163, %s177
      %p179 = scmp.eq.s32.totalorder %s27, 0
      %p180 = por %p178, %p179
      %s181 = ssub.s32 %s21, %s28
      %p182 = scmp.eq.s32.totalorder %s181, 0
      %s184 = sadd.s32 %s183, 1
      %s185 = scalar_select %p182, %s183, %s184
      %p188 = pneg %p182
      %p189 = scmp.eq.s32.totalorder %s21, 1
      %p190 = por %p188, %p189
      %p191 = scmp.ne.s32.totalorder %s183, %s186
      %p192 = scmp.eq.s32.totalorder %s21, 0
      %p193 = por %p191, %p192
      %p194 = scmp.ne.s32.totalorder %s183, %s186
      %p195 = scmp.eq.s32.totalorder %s26, 1
      %p196 = por %p194, %p195
      %p197 = scmp.ne.s32.totalorder %s186, %s187
      %p198 = scmp.eq.s32.totalorder %s26, 0
      %p199 = por %p197, %p198
      %p200 = scmp.ne.s32.totalorder %s186, %s187
      %p201 = scmp.eq.s32.totalorder %s27, 1
      %p202 = por %p200, %p201
      %p204 = scmp.ne.s32.totalorder %s187, %s203
      %p205 = scmp.eq.s32.totalorder %s27, 0
      %p206 = por %p204, %p205
      %p207 = scmp.le.s32.totalorder 1, %s21
      %p208 = scmp.lt.s32.totalorder %s21, 3
      %p209 = pnand %p207, %p208
      %p210 = pneg %p209
      // Predicated region
      $region9: #{tpu_custom_call.1} parent=5 // pred_check
        _
      $region10: #{tpu_custom_call.1} parent=5 // pred_check_branch
        %212 = sbr.rel (%p209) target = $region12
      $region11: #{tpu_custom_call.1} parent=5 // pred_region
        %s213 = ssub.s32 %s21, 1
        // Predicated region
        $region13: #{tpu_custom_call.1} parent=11 // pred_check
          %p214 = pneg %p68
        $region14: #{tpu_custom_call.1} parent=11 // pred_check_branch
          %216 = sbr.rel (%p214) target = $region16
        $region15: #{tpu_custom_call.1} parent=11 // pred_region
          %s218 = ssub.s32 1024, 1024
          %219 = vsyncadd [#allocation6], %s218
          %s220 = sshll.u32 [#allocation5], 4
          %s221 = int_to_ptr.vmem [resolvable:$true] %s220
          %226 = dma.hbm_to_vmem [thread:$0]  %s1, 1024, %s221, [#allocation6], 64, 64, 4
        $region16: #{tpu_custom_call.1} parent=11 // pred_fallthru
          _
        // Predicated region
        $region17: #{tpu_custom_call.1} parent=11 // pred_check
          %p227 = pneg %p89
        $region18: #{tpu_custom_call.1} parent=11 // pred_check_branch
          %229 = sbr.rel (%p227) target = $region20
        $region19: #{tpu_custom_call.1} parent=11 // pred_region
          _
        $region20: #{tpu_custom_call.1} parent=11 // pred_fallthru
          _
        // Predicated region
        $region21: #{tpu_custom_call.1} parent=11 // pred_check
          %p230 = pneg %p110
        $region22: #{tpu_custom_call.1} parent=11 // pred_check_branch
          %232 = sbr.rel (%p230) target = $region24
        $region23: #{tpu_custom_call.1} parent=11 // pred_region
          %s234 = ssub.s32 1024, 1024
          %235 = vsyncadd [#allocation6], %s234
          %s236 = sshll.u32 [#allocation7], 4
          %s237 = int_to_ptr.vmem [resolvable:$true] %s236
          %242 = dma.hbm_to_vmem [thread:$0]  %s3, 1024, %s237, [#allocation6], 64, 64, 4
        $region24: #{tpu_custom_call.1} parent=11 // pred_fallthru
          _
        // Predicated region
        $region25: #{tpu_custom_call.1} parent=11 // pred_check
          %p243 = pneg %p131
        $region26: #{tpu_custom_call.1} parent=11 // pred_check_branch
          %245 = sbr.rel (%p243) target = $region28
        $region27: #{tpu_custom_call.1} parent=11 // pred_region
          _
        $region28: #{tpu_custom_call.1} parent=11 // pred_fallthru
          _
        // Predicated region
        $region29: #{tpu_custom_call.1} parent=11 // pred_check
          %p246 = pneg %p152
        $region30: #{tpu_custom_call.1} parent=11 // pred_check_branch
          %248 = sbr.rel (%p246) target = $region32
        $region31: #{tpu_custom_call.1} parent=11 // pred_region
          %s250 = ssub.s32 1024, 1024
          %251 = vsyncadd [#allocation9], %s250
          %s252 = sshll.u32 [#allocation8], 4
          %s253 = int_to_ptr.vmem [resolvable:$true] %s252
          %258 = dma.hbm_to_vmem [thread:$0]  %s5, 1024, %s253, [#allocation9], 64, 64, 4
        $region32: #{tpu_custom_call.1} parent=11 // pred_fallthru
          _
        // Predicated region
        $region33: #{tpu_custom_call.1} parent=11 // pred_check
          %p259 = pneg %p173
        $region34: #{tpu_custom_call.1} parent=11 // pred_check_branch
          %261 = sbr.rel (%p259) target = $region36
        $region35: #{tpu_custom_call.1} parent=11 // pred_region
          _
        $region36: #{tpu_custom_call.1} parent=11 // pred_fallthru
          _
      $region12: #{tpu_custom_call.1} parent=5 // pred_fallthru
        _
      %p262 = scmp.lt.s32.totalorder %s21, 2
      // Predicated region
      $region37: #{tpu_custom_call.1} parent=5 // pred_check
        %p263 = pneg %p262
      $region38: #{tpu_custom_call.1} parent=5 // pred_check_branch
        %265 = sbr.rel (%p263) target = $region40
      $region39: #{tpu_custom_call.1} parent=5 // pred_region
        // Predicated region
        $region41: #{tpu_custom_call.1} parent=39 // pred_check
          %p266 = pneg %p41
        $region42: #{tpu_custom_call.1} parent=39 // pred_check_branch
          %268 = sbr.rel (%p266) target = $region44
        $region43: #{tpu_custom_call.1} parent=39 // pred_region
          %s269 = sand.u32 %s31, 1
          %s270 = scalar_lea.sflag [#allocation3], %s269
          %s271 = sand.u32 %s31, 1
          %s272 = smul.addr %s271, 64
          %s273 = scalar_lea.vmem [#allocation2], %s272
          %s274 = smul.u32 8, %s21
          %s276 = ssub.s32 1024, 1024
          %277 = vsyncadd %s270, %s276
          %s278 = smul.addr %s274, 128
          %s279 = scalar_lea.hbm %s0, %s278
          %s280 = sshll.u32 %s273, 4
          %s281 = int_to_ptr.vmem [resolvable:$true] %s280
          %286 = dma.hbm_to_vmem [thread:$0]  %s279, 1024, %s281, %s270, 128, 128, 8
        $region44: #{tpu_custom_call.1} parent=39 // pred_fallthru
          _
      $region40: #{tpu_custom_call.1} parent=5 // pred_fallthru
        _
      %p287 = scmp.le.s32.totalorder 1, %s21
      %p288 = scmp.lt.s32.totalorder %s21, 3
      %p289 = pnand %p287, %p288
      %p290 = pneg %p289
      // Predicated region
      $region45: #{tpu_custom_call.1} parent=5 // pred_check
        _
      $region46: #{tpu_custom_call.1} parent=5 // pred_check_branch
        %292 = sbr.rel (%p289) target = $region48
      $region47: #{tpu_custom_call.1} parent=5 // pred_region
        %s293 = ssub.s32 %s21, 1
        %s294 = sand.u32 %s34, 1
        %s295 = scalar_lea.sflag [#allocation3], %s294
        %s296 = sand.u32 %s34, 1
        %s297 = smul.addr %s296, 64
        %s298 = scalar_lea.vmem [#allocation2], %s297
        // Predicated region
        $region49: #{tpu_custom_call.1} parent=47 // pred_check
          %p299 = pneg %p47
        $region50: #{tpu_custom_call.1} parent=47 // pred_check_branch
          %301 = sbr.rel (%p299) target = $region52
        $region51: #{tpu_custom_call.1} parent=47 // pred_region
          %302 = dma.done %s295, 1024
        $region52: #{tpu_custom_call.1} parent=47 // pred_fallthru
          _
        // Predicated region
        $region53: #{tpu_custom_call.1} parent=47 // pred_check
          %p303 = pneg %p68
        $region54: #{tpu_custom_call.1} parent=47 // pred_check_branch
          %305 = sbr.rel (%p303) target = $region56
        $region55: #{tpu_custom_call.1} parent=47 // pred_region
          %306 = dma.done [#allocation6], 1024
        $region56: #{tpu_custom_call.1} parent=47 // pred_fallthru
          _
        // Predicated region
        $region57: #{tpu_custom_call.1} parent=47 // pred_check
          %p307 = pneg %p110
        $region58: #{tpu_custom_call.1} parent=47 // pred_check_branch
          %309 = sbr.rel (%p307) target = $region60
        $region59: #{tpu_custom_call.1} parent=47 // pred_region
          %310 = dma.done [#allocation6], 1024
        $region60: #{tpu_custom_call.1} parent=47 // pred_fallthru
          _
        // Predicated region
        $region61: #{tpu_custom_call.1} parent=47 // pred_check
          %p311 = pneg %p152
        $region62: #{tpu_custom_call.1} parent=47 // pred_check_branch
          %313 = sbr.rel (%p311) target = $region64
        $region63: #{tpu_custom_call.1} parent=47 // pred_region
          %314 = dma.done [#allocation9], 1024
        $region64: #{tpu_custom_call.1} parent=47 // pred_fallthru
          _
        %s315 = sand.u32 %s34, 1
        %s316 = scalar_lea.sflag [#allocation3], %s315
        %s317 = sand.u32 %s34, 1
        %s318 = smul.addr %s317, 64
        %s319 = scalar_lea.vmem [#allocation2], %s318
        %p320 = pneg %p47
        %p321 = pneg %p44
        %p322 = pneg %p68
        %p323 = pneg %p65
        %p324 = pneg %p89
        %p325 = pneg %p86
        %p326 = pneg %p110
        %p327 = pneg %p107
        %p328 = pneg %p131
        %p329 = pneg %p128
        %p330 = pneg %p152
        %p331 = pneg %p149
        %p332 = pneg %p173
        %p333 = pneg %p170
        %p334 = pneg %p199
        %p335 = pneg %p196
        %s336 = sand.u32 %s186, 1
        %s337 = scalar_lea.sflag [#allocation4], %s336
        %s338 = sand.u32 %s186, 1
        %s339 = smul.addr %s338, 64
        %s340 = scalar_lea.vmem [#allocation10], %s339
        %s341 = smul.u32 8, %s26
        %s342 = smul.u32 8, %s26
        %v344 = vld [vmem:[%s298] sm:$0xff]
        %v345 = vld [vmem:[%s298 + $0x8] sm:$0xff]
        %v346 = vld [vmem:[%s298 + $0x10] sm:$0xff]
        %v347 = vld [vmem:[%s298 + $0x18] sm:$0xff]
        %v348 = vld [vmem:[%s298 + $0x20] sm:$0xff]
        %v349 = vld [vmem:[%s298 + $0x28] sm:$0xff]
        %v350 = vld [vmem:[%s298 + $0x30] sm:$0xff]
        %v351 = vld [vmem:[%s298 + $0x38] sm:$0xff]
        %v352 = vld [vmem:[#allocation5] sm:$0xf]
        %v353 = vld [vmem:[#allocation5 + $0x4] sm:$0xf]
        %v354 = vld [vmem:[#allocation5 + $0x8] sm:$0xf]
        %v355 = vld [vmem:[#allocation5 + $0xc] sm:$0xf]
        %v356 = vld [vmem:[#allocation5 + $0x10] sm:$0xf]
        %v357 = vld [vmem:[#allocation5 + $0x14] sm:$0xf]
        %v358 = vld [vmem:[#allocation5 + $0x18] sm:$0xf]
        %v359 = vld [vmem:[#allocation5 + $0x1c] sm:$0xf]
        %v360 = vld [vmem:[#allocation5 + $0x20] sm:$0xf]
        %v361 = vld [vmem:[#allocation5 + $0x24] sm:$0xf]
        %v362 = vld [vmem:[#allocation5 + $0x28] sm:$0xf]
        %v363 = vld [vmem:[#allocation5 + $0x2c] sm:$0xf]
        %v364 = vld [vmem:[#allocation5 + $0x30] sm:$0xf]
        %v365 = vld [vmem:[#allocation5 + $0x34] sm:$0xf]
        %v366 = vld [vmem:[#allocation5 + $0x38] sm:$0xf]
        %v367 = vld [vmem:[#allocation5 + $0x3c] sm:$0xf]
        %v368 = vld [vmem:[%s2] sm:$0x1]
        %v369 = vpack.c.bf16 %v345, %v344
        %v370 = vpack.c.bf16 %v347, %v346
        %v371 = vpack.c.bf16 %v349, %v348
        %v372 = vpack.c.bf16 %v351, %v350
        %v374 = vlaneseq
        %v375 = vshrl.u32 %v374, 7
        %v376 = vsub.s32 0, %v375
        %v377 = vrot.slane %v368, %v376
        %v395 = vunpack.c.l.b16 %v352
        %v396 = vunpack.c.l.b16 %v353
        %v397 = vunpack.c.l.b16 %v354
        %v398 = vunpack.c.l.b16 %v355
        %v399 = vunpack.c.l.b16 %v356
        %v400 = vunpack.c.l.b16 %v357
        %v401 = vunpack.c.l.b16 %v358
        %v402 = vunpack.c.l.b16 %v359
        %v403 = vunpack.c.l.b16 %v360
        %v404 = vunpack.c.l.b16 %v361
        %v405 = vunpack.c.l.b16 %v362
        %v406 = vunpack.c.l.b16 %v363
        %v407 = vunpack.c.l.b16 %v364
        %v408 = vunpack.c.l.b16 %v365
        %v409 = vunpack.c.l.b16 %v366
        %v410 = vunpack.c.l.b16 %v367
        %v411 = vpack.c.b16 %v396, %v395
        %v412 = vpack.c.b16 %v398, %v397
        %v413 = vpack.c.b16 %v400, %v399
        %v414 = vpack.c.b16 %v402, %v401
        %v415 = vpack.c.b16 %v404, %v403
        %v416 = vpack.c.b16 %v406, %v405
        %v417 = vpack.c.b16 %v408, %v407
        %v418 = vpack.c.b16 %v410, %v409
        %427 = vmatprep.subr.bf16.mxu0 0
        %428 = vmatpush1.bf16.msra.mxu0 %v418
        %429 = vmatprep.subr.bf16.mxu0 0
        %430 = vmatpush1.bf16.msra.mxu0 %v417
        %431 = vmatprep.subr.bf16.mxu0 0
        %432 = vmatpush1.bf16.msra.mxu0 %v416
        %433 = vmatprep.subr.bf16.mxu0 0
        %434 = vmatpush1.bf16.msra.mxu0 %v415
        %435 = vmatprep.subr.bf16.mxu0 0
        %436 = vmatpush1.bf16.msra.mxu0 %v414
        %437 = vmatprep.subr.bf16.mxu0 0
        %438 = vmatpush1.bf16.msra.mxu0 %v413
        %439 = vmatprep.subr.bf16.mxu0 0
        %440 = vmatpush1.bf16.msra.mxu0 %v412
        %441 = vmatprep.subr.bf16.mxu0 0
        %442 = vmatpush1.bf16.msra.mxu0 %v411
        %443 = vmatprep.subr.bf16.mxu0 0
        %444 = vmatpush2.bf16.msra.mxu0 0
        %445 = vmatprep.subr.bf16.mxu0 0
        %446 = vmatpush2.bf16.msra.mxu0 0
        %447 = vmatprep.subr.bf16.mxu0 0
        %448 = vmatpush2.bf16.msra.mxu0 0
        %449 = vmatprep.subr.bf16.mxu0 0
        %450 = vmatpush2.bf16.msra.mxu0 0
        %451 = vmatprep.subr.bf16.mxu0 0
        %452 = vmatpush2.bf16.msra.mxu0 0
        %453 = vmatprep.subr.bf16.mxu0 0
        %454 = vmatpush2.bf16.msra.mxu0 0
        %455 = vmatprep.subr.bf16.mxu0 0
        %456 = vmatpush2.bf16.msra.mxu0 0
        %457 = vmatprep.subr.bf16.mxu0 0
        %458 = vmatpush2.bf16.msra.mxu0 0
        %459 = vmatprep.mubr.bf16.mxu0 0
        %460 = vmatmul.mubr.bf16.gmra.mxu0 %v369
        %v461 = vpop.f32.mrf.mxu0
        %v462 = vadd.f32 %v377, %v461
        %v463 = vpop.f32.mrf.mxu0
        %v464 = vpop.f32.mrf.mxu0
        %v465 = vadd.f32 %v377, %v464
        %v466 = vpop.f32.mrf.mxu0
        %467 = vmatprep.mubr.bf16.mxu0 0
        %468 = vmatmul.mubr.bf16.gmra.mxu0 %v370
        %v469 = vpop.f32.mrf.mxu0
        %v470 = vadd.f32 %v377, %v469
        %v471 = vpop.f32.mrf.mxu0
        %v472 = vpop.f32.mrf.mxu0
        %v473 = vadd.f32 %v377, %v472
        %v474 = vpop.f32.mrf.mxu0
        %475 = vmatprep.mubr.bf16.mxu0 0
        %476 = vmatmul.mubr.bf16.gmra.mxu0 %v371
        %v477 = vpop.f32.mrf.mxu0
        %v478 = vadd.f32 %v377, %v477
        %v479 = vpop.f32.mrf.mxu0
        %v480 = vpop.f32.mrf.mxu0
        %v481 = vadd.f32 %v377, %v480
        %v482 = vpop.f32.mrf.mxu0
        %483 = vmatprep.mubr.bf16.mxu0 0
        %484 = vmatmul.mubr.bf16.gmra.mxu0 %v372
        %v485 = vpop.f32.mrf.mxu0
        %v486 = vadd.f32 %v377, %v485
        %v487 = vpop.f32.mrf.mxu0
        %v488 = vpop.f32.mrf.mxu0
        %v489 = vadd.f32 %v377, %v488
        %v490 = vpop.f32.mrf.mxu0
        %491 = vdwg.mxu0
        %v492 = vmax.f32 %v462, 0.0
        %v493 = vmax.f32 %v465, 0.0
        %v494 = vmax.f32 %v470, 0.0
        %v495 = vmax.f32 %v473, 0.0
        %v496 = vmax.f32 %v478, 0.0
        %v497 = vmax.f32 %v481, 0.0
        %v498 = vmax.f32 %v486, 0.0
        %v499 = vmax.f32 %v489, 0.0
        %v500 = vld [vmem:[#allocation7] sm:$0xf]
        %v501 = vld [vmem:[#allocation7 + $0x4] sm:$0xf]
        %v502 = vld [vmem:[#allocation7 + $0x8] sm:$0xf]
        %v503 = vld [vmem:[#allocation7 + $0xc] sm:$0xf]
        %v504 = vld [vmem:[#allocation7 + $0x10] sm:$0xf]
        %v505 = vld [vmem:[#allocation7 + $0x14] sm:$0xf]
        %v506 = vld [vmem:[#allocation7 + $0x18] sm:$0xf]
        %v507 = vld [vmem:[#allocation7 + $0x1c] sm:$0xf]
        %v508 = vld [vmem:[#allocation7 + $0x20] sm:$0xf]
        %v509 = vld [vmem:[#allocation7 + $0x24] sm:$0xf]
        %v510 = vld [vmem:[#allocation7 + $0x28] sm:$0xf]
        %v511 = vld [vmem:[#allocation7 + $0x2c] sm:$0xf]
        %v512 = vld [vmem:[#allocation7 + $0x30] sm:$0xf]
        %v513 = vld [vmem:[#allocation7 + $0x34] sm:$0xf]
        %v514 = vld [vmem:[#allocation7 + $0x38] sm:$0xf]
        %v515 = vld [vmem:[#allocation7 + $0x3c] sm:$0xf]
        %v516 = vld [vmem:[%s4] sm:$0x1]
        %v517 = vpack.c.bf16 %v493, %v492
        %v518 = vpack.c.bf16 %v495, %v494
        %v519 = vpack.c.bf16 %v497, %v496
        %v520 = vpack.c.bf16 %v499, %v498
        %v522 = vlaneseq
        %v523 = vshrl.u32 %v522, 7
        %v524 = vsub.s32 0, %v523
        %v525 = vrot.slane %v516, %v524
        %v543 = vunpack.c.l.b16 %v500
        %v544 = vunpack.c.l.b16 %v501
        %v545 = vunpack.c.l.b16 %v502
        %v546 = vunpack.c.l.b16 %v503
        %v547 = vunpack.c.l.b16 %v504
        %v548 = vunpack.c.l.b16 %v505
        %v549 = vunpack.c.l.b16 %v506
        %v550 = vunpack.c.l.b16 %v507
        %v551 = vunpack.c.l.b16 %v508
        %v552 = vunpack.c.l.b16 %v509
        %v553 = vunpack.c.l.b16 %v510
        %v554 = vunpack.c.l.b16 %v511
        %v555 = vunpack.c.l.b16 %v512
        %v556 = vunpack.c.l.b16 %v513
        %v557 = vunpack.c.l.b16 %v514
        %v558 = vunpack.c.l.b16 %v515
        %v559 = vpack.c.b16 %v544, %v543
        %v560 = vpack.c.b16 %v546, %v545
        %v561 = vpack.c.b16 %v548, %v547
        %v562 = vpack.c.b16 %v550, %v549
        %v563 = vpack.c.b16 %v552, %v551
        %v564 = vpack.c.b16 %v554, %v553
        %v565 = vpack.c.b16 %v556, %v555
        %v566 = vpack.c.b16 %v558, %v557
        %575 = vmatprep.subr.bf16.mxu0 0
        %576 = vmatpush1.bf16.msra.mxu0 %v566
        %577 = vmatprep.subr.bf16.mxu0 0
        %578 = vmatpush1.bf16.msra.mxu0 %v565
        %579 = vmatprep.subr.bf16.mxu0 0
        %580 = vmatpush1.bf16.msra.mxu0 %v564
        %581 = vmatprep.subr.bf16.mxu0 0
        %582 = vmatpush1.bf16.msra.mxu0 %v563
        %583 = vmatprep.subr.bf16.mxu0 0
        %584 = vmatpush1.bf16.msra.mxu0 %v562
        %585 = vmatprep.subr.bf16.mxu0 0
        %586 = vmatpush1.bf16.msra.mxu0 %v561
        %587 = vmatprep.subr.bf16.mxu0 0
        %588 = vmatpush1.bf16.msra.mxu0 %v560
        %589 = vmatprep.subr.bf16.mxu0 0
        %590 = vmatpush1.bf16.msra.mxu0 %v559
        %591 = vmatprep.subr.bf16.mxu0 0
        %592 = vmatpush2.bf16.msra.mxu0 0
        %593 = vmatprep.subr.bf16.mxu0 0
        %594 = vmatpush2.bf16.msra.mxu0 0
        %595 = vmatprep.subr.bf16.mxu0 0
        %596 = vmatpush2.bf16.msra.mxu0 0
        %597 = vmatprep.subr.bf16.mxu0 0
        %598 = vmatpush2.bf16.msra.mxu0 0
        %599 = vmatprep.subr.bf16.mxu0 0
        %600 = vmatpush2.bf16.msra.mxu0 0
        %601 = vmatprep.subr.bf16.mxu0 0
        %602 = vmatpush2.bf16.msra.mxu0 0
        %603 = vmatprep.subr.bf16.mxu0 0
        %604 = vmatpush2.bf16.msra.mxu0 0
        %605 = vmatprep.subr.bf16.mxu0 0
        %606 = vmatpush2.bf16.msra.mxu0 0
        %607 = vmatprep.mubr.bf16.mxu0 0
        %608 = vmatmul.mubr.bf16.gmra.mxu0 %v517
        %v609 = vpop.f32.mrf.mxu0
        %v610 = vadd.f32 %v525, %v609
        %v611 = vpop.f32.mrf.mxu0
        %v612 = vpop.f32.mrf.mxu0
        %v613 = vadd.f32 %v525, %v612
        %v614 = vpop.f32.mrf.mxu0
        %615 = vmatprep.mubr.bf16.mxu0 0
        %616 = vmatmul.mubr.bf16.gmra.mxu0 %v518
        %v617 = vpop.f32.mrf.mxu0
        %v618 = vadd.f32 %v525, %v617
        %v619 = vpop.f32.mrf.mxu0
        %v620 = vpop.f32.mrf.mxu0
        %v621 = vadd.f32 %v525, %v620
        %v622 = vpop.f32.mrf.mxu0
        %623 = vmatprep.mubr.bf16.mxu0 0
        %624 = vmatmul.mubr.bf16.gmra.mxu0 %v519
        %v625 = vpop.f32.mrf.mxu0
        %v626 = vadd.f32 %v525, %v625
        %v627 = vpop.f32.mrf.mxu0
        %v628 = vpop.f32.mrf.mxu0
        %v629 = vadd.f32 %v525, %v628
        %v630 = vpop.f32.mrf.mxu0
        %631 = vmatprep.mubr.bf16.mxu0 0
        %632 = vmatmul.mubr.bf16.gmra.mxu0 %v520
        %v633 = vpop.f32.mrf.mxu0
        %v634 = vadd.f32 %v525, %v633
        %v635 = vpop.f32.mrf.mxu0
        %v636 = vpop.f32.mrf.mxu0
        %v637 = vadd.f32 %v525, %v636
        %v638 = vpop.f32.mrf.mxu0
        %639 = vdwg.mxu0
        %v640 = vmax.f32 %v610, 0.0
        %v641 = vmax.f32 %v613, 0.0
        %v642 = vmax.f32 %v618, 0.0
        %v643 = vmax.f32 %v621, 0.0
        %v644 = vmax.f32 %v626, 0.0
        %v645 = vmax.f32 %v629, 0.0
        %v646 = vmax.f32 %v634, 0.0
        %v647 = vmax.f32 %v637, 0.0
        %v648 = vld [vmem:[#allocation8] sm:$0xf]
        %v649 = vld [vmem:[#allocation8 + $0x4] sm:$0xf]
        %v650 = vld [vmem:[#allocation8 + $0x8] sm:$0xf]
        %v651 = vld [vmem:[#allocation8 + $0xc] sm:$0xf]
        %v652 = vld [vmem:[#allocation8 + $0x10] sm:$0xf]
        %v653 = vld [vmem:[#allocation8 + $0x14] sm:$0xf]
        %v654 = vld [vmem:[#allocation8 + $0x18] sm:$0xf]
        %v655 = vld [vmem:[#allocation8 + $0x1c] sm:$0xf]
        %v656 = vld [vmem:[#allocation8 + $0x20] sm:$0xf]
        %v657 = vld [vmem:[#allocation8 + $0x24] sm:$0xf]
        %v658 = vld [vmem:[#allocation8 + $0x28] sm:$0xf]
        %v659 = vld [vmem:[#allocation8 + $0x2c] sm:$0xf]
        %v660 = vld [vmem:[#allocation8 + $0x30] sm:$0xf]
        %v661 = vld [vmem:[#allocation8 + $0x34] sm:$0xf]
        %v662 = vld [vmem:[#allocation8 + $0x38] sm:$0xf]
        %v663 = vld [vmem:[#allocation8 + $0x3c] sm:$0xf]
        %v664 = vld [vmem:[%s6] sm:$0x1]
        %v665 = vpack.c.bf16 %v641, %v640
        %v666 = vpack.c.bf16 %v643, %v642
        %v667 = vpack.c.bf16 %v645, %v644
        %v668 = vpack.c.bf16 %v647, %v646
        %v670 = vlaneseq
        %v671 = vshrl.u32 %v670, 7
        %v672 = vsub.s32 0, %v671
        %v673 = vrot.slane %v664, %v672
        %v691 = vunpack.c.l.b16 %v648
        %v692 = vunpack.c.l.b16 %v649
        %v693 = vunpack.c.l.b16 %v650
        %v694 = vunpack.c.l.b16 %v651
        %v695 = vunpack.c.l.b16 %v652
        %v696 = vunpack.c.l.b16 %v653
        %v697 = vunpack.c.l.b16 %v654
        %v698 = vunpack.c.l.b16 %v655
        %v699 = vunpack.c.l.b16 %v656
        %v700 = vunpack.c.l.b16 %v657
        %v701 = vunpack.c.l.b16 %v658
        %v702 = vunpack.c.l.b16 %v659
        %v703 = vunpack.c.l.b16 %v660
        %v704 = vunpack.c.l.b16 %v661
        %v705 = vunpack.c.l.b16 %v662
        %v706 = vunpack.c.l.b16 %v663
        %v707 = vpack.c.b16 %v692, %v691
        %v708 = vpack.c.b16 %v694, %v693
        %v709 = vpack.c.b16 %v696, %v695
        %v710 = vpack.c.b16 %v698, %v697
        %v711 = vpack.c.b16 %v700, %v699
        %v712 = vpack.c.b16 %v702, %v701
        %v713 = vpack.c.b16 %v704, %v703
        %v714 = vpack.c.b16 %v706, %v705
        %723 = vmatprep.subr.bf16.mxu0 0
        %724 = vmatpush1.bf16.msra.mxu0 %v714
        %725 = vmatprep.subr.bf16.mxu0 0
        %726 = vmatpush1.bf16.msra.mxu0 %v713
        %727 = vmatprep.subr.bf16.mxu0 0
        %728 = vmatpush1.bf16.msra.mxu0 %v712
        %729 = vmatprep.subr.bf16.mxu0 0
        %730 = vmatpush1.bf16.msra.mxu0 %v711
        %731 = vmatprep.subr.bf16.mxu0 0
        %732 = vmatpush1.bf16.msra.mxu0 %v710
        %733 = vmatprep.subr.bf16.mxu0 0
        %734 = vmatpush1.bf16.msra.mxu0 %v709
        %735 = vmatprep.subr.bf16.mxu0 0
        %736 = vmatpush1.bf16.msra.mxu0 %v708
        %737 = vmatprep.subr.bf16.mxu0 0
        %738 = vmatpush1.bf16.msra.mxu0 %v707
        %739 = vmatprep.subr.bf16.mxu0 0
        %740 = vmatpush2.bf16.msra.mxu0 0
        %741 = vmatprep.subr.bf16.mxu0 0
        %742 = vmatpush2.bf16.msra.mxu0 0
        %743 = vmatprep.subr.bf16.mxu0 0
        %744 = vmatpush2.bf16.msra.mxu0 0
        %745 = vmatprep.subr.bf16.mxu0 0
        %746 = vmatpush2.bf16.msra.mxu0 0
        %747 = vmatprep.subr.bf16.mxu0 0
        %748 = vmatpush2.bf16.msra.mxu0 0
        %749 = vmatprep.subr.bf16.mxu0 0
        %750 = vmatpush2.bf16.msra.mxu0 0
        %751 = vmatprep.subr.bf16.mxu0 0
        %752 = vmatpush2.bf16.msra.mxu0 0
        %753 = vmatprep.subr.bf16.mxu0 0
        %754 = vmatpush2.bf16.msra.mxu0 0
        %755 = vmatprep.mubr.bf16.mxu0 0
        %756 = vmatmul.mubr.bf16.gmra.mxu0 %v665
        %v757 = vpop.f32.mrf.mxu0
        %v758 = vadd.f32 %v673, %v757
        %v759 = vpop.f32.mrf.mxu0
        %v760 = vpop.f32.mrf.mxu0
        %v761 = vadd.f32 %v673, %v760
        %v762 = vpop.f32.mrf.mxu0
        %763 = vmatprep.mubr.bf16.mxu0 0
        %764 = vmatmul.mubr.bf16.gmra.mxu0 %v666
        %v765 = vpop.f32.mrf.mxu0
        %v766 = vadd.f32 %v673, %v765
        %v767 = vpop.f32.mrf.mxu0
        %v768 = vpop.f32.mrf.mxu0
        %v769 = vadd.f32 %v673, %v768
        %v770 = vpop.f32.mrf.mxu0
        %771 = vmatprep.mubr.bf16.mxu0 0
        %772 = vmatmul.mubr.bf16.gmra.mxu0 %v667
        %v773 = vpop.f32.mrf.mxu0
        %v774 = vadd.f32 %v673, %v773
        %v775 = vpop.f32.mrf.mxu0
        %v776 = vpop.f32.mrf.mxu0
        %v777 = vadd.f32 %v673, %v776
        %v778 = vpop.f32.mrf.mxu0
        %779 = vmatprep.mubr.bf16.mxu0 0
        %780 = vmatmul.mubr.bf16.gmra.mxu0 %v668
        %v781 = vpop.f32.mrf.mxu0
        %v782 = vadd.f32 %v673, %v781
        %v783 = vpop.f32.mrf.mxu0
        %v784 = vpop.f32.mrf.mxu0
        %v785 = vadd.f32 %v673, %v784
        %v786 = vpop.f32.mrf.mxu0
        %787 = vdwg.mxu0
        %788 = vst [vmem:[%s340] sm:$0xff] %v758
        %789 = vst [vmem:[%s340 + $0x8] sm:$0xff] %v761
        %790 = vst [vmem:[%s340 + $0x10] sm:$0xff] %v766
        %791 = vst [vmem:[%s340 + $0x18] sm:$0xff] %v769
        %792 = vst [vmem:[%s340 + $0x20] sm:$0xff] %v774
        %793 = vst [vmem:[%s340 + $0x28] sm:$0xff] %v777
        %794 = vst [vmem:[%s340 + $0x30] sm:$0xff] %v782
        %795 = vst [vmem:[%s340 + $0x38] sm:$0xff] %v785
        %s796 = sand.u32 %s186, 1
        %s797 = scalar_lea.sflag [#allocation4], %s796
        %s798 = sand.u32 %s186, 1
        %s799 = smul.addr %s798, 64
        %s800 = scalar_lea.vmem [#allocation10], %s799
        // Predicated region
        $region65: #{tpu_custom_call.1} parent=47 // pred_check
          %p801 = pneg %p196
        $region66: #{tpu_custom_call.1} parent=47 // pred_check_branch
          %803 = sbr.rel (%p801) target = $region68
        $region67: #{tpu_custom_call.1} parent=47 // pred_region
          %s804 = smul.u32 8, %s26
          %s806 = ssub.s32 1024, 1024
          %807 = vsyncadd %s797, %s806
          %s808 = smul.addr %s804, 128
          %s809 = scalar_lea.hbm %s7, %s808
          %s810 = sshll.u32 %s800, 4
          %s811 = int_to_ptr.vmem [resolvable:$true] %s810
          %816 = dma.vmem_to_hbm [thread:$0]  %s811, 1024, %s809, %s797, 128, 128, 8
        $region68: #{tpu_custom_call.1} parent=47 // pred_fallthru
          _
      $region48: #{tpu_custom_call.1} parent=5 // pred_fallthru
        _
      %p817 = scmp.le.s32.totalorder 2, %s21
      // Predicated region
      $region69: #{tpu_custom_call.1} parent=5 // pred_check
        %p818 = pneg %p817
      $region70: #{tpu_custom_call.1} parent=5 // pred_check_branch
        %820 = sbr.rel (%p818) target = $region72
      $region71: #{tpu_custom_call.1} parent=5 // pred_region
        %s821 = ssub.s32 %s21, 2
        // Predicated region
        $region73: #{tpu_custom_call.1} parent=71 // pred_check
          %p822 = pneg %p202
        $region74: #{tpu_custom_call.1} parent=71 // pred_check_branch
          %824 = sbr.rel (%p822) target = $region76
        $region75: #{tpu_custom_call.1} parent=71 // pred_region
          %s825 = sand.u32 %s187, 1
          %s826 = scalar_lea.sflag [#allocation4], %s825
          %s827 = sand.u32 %s187, 1
          %s828 = smul.addr %s827, 64
          %s829 = scalar_lea.vmem [#allocation10], %s828
          %830 = dma.done %s826, 1024
        $region76: #{tpu_custom_call.1} parent=71 // pred_fallthru
          _
      $region72: #{tpu_custom_call.1} parent=5 // pred_fallthru
        _
    $region6: #{tpu_custom_call.1} parent=1 // loop_footer
      %s25 = sadd.s32 1, %s21
    $region7: #{tpu_custom_call.1} parent=1 // loop_footer_branch
      %20 = sbr.rel target = $region3
    $region8: #{tpu_custom_call.1} parent=1 // loop_exit
      _
    %831 = vsyncpa [#allocation3], 1
    %s832 = scalar_lea.sflag [#allocation3], 1
    %833 = vsyncpa %s832, 1
    %834 = vsyncpa [#allocation6], 1
    %835 = vsyncpa [#allocation9], 1
    %836 = vsyncpa [#allocation4], 1
    %s837 = scalar_lea.sflag [#allocation4], 1
    %838 = vsyncpa %s837, 1

// kernel: tpu_custom_call.1
$region0: #{tpu_custom_call.1}
  #allocation0 [shape = 'u32[]', space=smem, size = 0x4, offset = 0x4, fixed_abs, tag = 'smem constant byte address 0x4 - core index']
  #allocation1 [shape = 'u32[144,128]{1,0:T(1,128)}', space=vmem, size = 0x12000, scoped, tag = 'internal scratch']
  %s0 = inlined_call_operand.hbm [shape: f32[128,128], index: 0, kind: input, shape index: {}]
  %s1 = inlined_call_operand.hbm [shape: bf16[128,128], index: 1, kind: input, shape index: {}]
  %s2 = inlined_call_operand.vmem [shape: f32[1,128], index: 2, kind: input, shape index: {}]
  %s3 = inlined_call_operand.hbm [shape: bf16[128,128], index: 3, kind: input, shape index: {}]
  %s4 = inlined_call_operand.vmem [shape: f32[1,128], index: 4, kind: input, shape index: {}]
  %s5 = inlined_call_operand.hbm [shape: bf16[128,128], index: 5, kind: input, shape index: {}]
  %s6 = inlined_call_operand.vmem [shape: f32[1,128], index: 6, kind: input, shape index: {}]
  %s7 = inlined_call_operand.hbm [shape: f32[128,128], index: 7, kind: output, shape index: {}]
  %s8 = sld [smem:[#allocation0]]
  $region77: #{tpu_custom_call.1} parent=0
    _
  %s10 = ssub.s32 1, %s8
  %s11 = scalar_select 0, %s10, %s8
  $region1: #{tpu_custom_call.1} parent=0
    #allocation2 [shape = 'u8[65536]{0}', space=vmem, size = 0x10000, scoped, tag = 'input window, operand 0']
    #allocation3 [shape = 's32[2]{0}', space=sflag, size = 0x8, scoped, tag = 'scoped memory for tpu_custom_call.1']
    #allocation4 [shape = 's32[2]{0}', space=sflag, size = 0x8, scoped, tag = 'scoped memory for tpu_custom_call.1']
    #allocation5 [shape = 'u8[32768]{0}', space=vmem, size = 0x8000, scoped, tag = 'input window, operand 1, single buffered']
    #allocation6 [shape = 's32[1]{0}', space=sflag, size = 0x4, scoped, tag = 'scoped memory for tpu_custom_call.1']
    #allocation7 [shape = 'u8[32768]{0}', space=vmem, size = 0x8000, scoped, tag = 'input window, operand 3, single buffered']
    #allocation8 [shape = 'u8[32768]{0}', space=vmem, size = 0x8000, scoped, tag = 'input window, operand 5, single buffered']
    #allocation9 [shape = 's32[1]{0}', space=sflag, size = 0x4, scoped, tag = 'scoped memory for tpu_custom_call.1']
    #allocation10 [shape = 'u8[65536]{0}', space=vmem, size = 0x10000, scoped, tag = 'output window, operand 0']
    %12 = vsyncpa [#allocation3], 0
    %s13 = scalar_lea.sflag [#allocation3], 1
    %14 = vsyncpa %s13, 0
    %15 = vsyncpa [#allocation6], 0
    %16 = vsyncpa [#allocation9], 0
    %17 = vsyncpa [#allocation4], 0
    %s18 = scalar_lea.sflag [#allocation4], 1
    %19 = vsyncpa %s18, 0
    loop: start=0, step=1, limit=4
    $region2: #{tpu_custom_call.1} parent=1 // loop_pre_header
      _
    $region3: #{tpu_custom_call.1} parent=1 // loop_header
      %s21 = sphi 0, %s25
      %p22 = scmp.ge.s32.totalorder %s21, 4
      %s31 = sphi 0, %s33
      %s34 = sphi 0, %s31
      %s35 = sphi 0, %s34
      %s51 = sphi 0, %s35
      %s55 = sphi 0, %s55
      %s57 = sphi 0, %s55
      %s58 = sphi 0, %s57
      %s72 = sphi 0, %s58
      %s76 = sphi 0, %s76
      %s78 = sphi 0, %s76
      %s79 = sphi 0, %s78
      %s93 = sphi 0, %s79
      %s97 = sphi 0, %s97
      %s99 = sphi 0, %s97
      %s100 = sphi 0, %s99
      %s114 = sphi 0, %s100
      %s118 = sphi 0, %s118
      %s120 = sphi 0, %s118
      %s121 = sphi 0, %s120
      %s135 = sphi 0, %s121
      %s139 = sphi 0, %s139
      %s141 = sphi 0, %s139
      %s142 = sphi 0, %s141
      %s156 = sphi 0, %s142
      %s160 = sphi 0, %s160
      %s162 = sphi 0, %s160
      %s163 = sphi 0, %s162
      %s177 = sphi 0, %s163
      %s183 = sphi 0, %s185
      %s186 = sphi 0, %s183
      %s187 = sphi 0, %s186
      %s203 = sphi 0, %s187
    $region4: #{tpu_custom_call.1} parent=1 // loop_header_branch
      %24 = sbr.rel (%p22) target = $region8
    $region5: #{tpu_custom_call.1} parent=1 // loop_body
      %s26 = ssub.s32 %s21, 1
      %s27 = ssub.s32 %s21, 2
      %s28 = sadd.s32 %s21, 1
      %s29 = ssub.s32 %s21, %s28
      %p30 = scmp.eq.s32.totalorder %s29, 0
      %s32 = sadd.s32 %s31, 1
      %s33 = scalar_select %p30, %s31, %s32
      %p36 = pneg %p30
      %p37 = scmp.eq.s32.totalorder %s21, 1
      %p38 = por %p36, %p37
      %p39 = scmp.ne.s32.totalorder %s31, %s34
      %p40 = scmp.eq.s32.totalorder %s21, 0
      %p41 = por %p39, %p40
      %p42 = scmp.ne.s32.totalorder %s31, %s34
      %p43 = scmp.eq.s32.totalorder %s26, 1
      %p44 = por %p42, %p43
      %p45 = scmp.ne.s32.totalorder %s34, %s35
      %p46 = scmp.eq.s32.totalorder %s26, 0
      %p47 = por %p45, %p46
      %p48 = scmp.ne.s32.totalorder %s34, %s35
      %p49 = scmp.eq.s32.totalorder %s27, 1
      %p50 = por %p48, %p49
      %p52 = scmp.ne.s32.totalorder %s35, %s51
      %p53 = scmp.eq.s32.totalorder %s27, 0
      %p54 = por %p52, %p53
      %s56 = sadd.s32 %s55, 1
      %p59 = scmp.eq.s32.totalorder %s21, 1
      %p60 = scmp.ne.s32.totalorder %s55, %s57
      %p61 = scmp.eq.s32.totalorder %s21, 0
      %p62 = por %p60, %p61
      %p63 = scmp.ne.s32.totalorder %s55, %s57
      %p64 = scmp.eq.s32.totalorder %s26, 1
      %p65 = por %p63, %p64
      %p66 = scmp.ne.s32.totalorder %s57, %s58
      %p67 = scmp.eq.s32.totalorder %s26, 0
      %p68 = por %p66, %p67
      %p69 = scmp.ne.s32.totalorder %s57, %s58
      %p70 = scmp.eq.s32.totalorder %s27, 1
      %p71 = por %p69, %p70
      %p73 = scmp.ne.s32.totalorder %s58, %s72
      %p74 = scmp.eq.s32.totalorder %s27, 0
      %p75 = por %p73, %p74
      %s77 = sadd.s32 %s76, 1
      %p80 = scmp.eq.s32.totalorder %s21, 1
      %p81 = scmp.ne.s32.totalorder %s76, %s78
      %p82 = scmp.eq.s32.totalorder %s21, 0
      %p83 = por %p81, %p82
      %p84 = scmp.ne.s32.totalorder %s76, %s78
      %p85 = scmp.eq.s32.totalorder %s26, 1
      %p86 = por %p84, %p85
      %p87 = scmp.ne.s32.totalorder %s78, %s79
      %p88 = scmp.eq.s32.totalorder %s26, 0
      %p89 = por %p87, %p88
      %p90 = scmp.ne.s32.totalorder %s78, %s79
      %p91 = scmp.eq.s32.totalorder %s27, 1
      %p92 = por %p90, %p91
      %p94 = scmp.ne.s32.totalorder %s79, %s93
      %p95 = scmp.eq.s32.totalorder %s27, 0
      %p96 = por %p94, %p95
      %s98 = sadd.s32 %s97, 1
      %p101 = scmp.eq.s32.totalorder %s21, 1
      %p102 = scmp.ne.s32.totalorder %s97, %s99
      %p103 = scmp.eq.s32.totalorder %s21, 0
      %p104 = por %p102, %p103
      %p105 = scmp.ne.s32.totalorder %s97, %s99
      %p106 = scmp.eq.s32.totalorder %s26, 1
      %p107 = por %p105, %p106
      %p108 = scmp.ne.s32.totalorder %s99, %s100
      %p109 = scmp.eq.s32.totalorder %s26, 0
      %p110 = por %p108, %p109
      %p111 = scmp.ne.s32.totalorder %s99, %s100
      %p112 = scmp.eq.s32.totalorder %s27, 1
      %p113 = por %p111, %p112
      %p115 = scmp.ne.s32.totalorder %s100, %s114
      %p116 = scmp.eq.s32.totalorder %s27, 0
      %p117 = por %p115, %p116
      %s119 = sadd.s32 %s118, 1
      %p122 = scmp.eq.s32.totalorder %s21, 1
      %p123 = scmp.ne.s32.totalorder %s118, %s120
      %p124 = scmp.eq.s32.totalorder %s21, 0
      %p125 = por %p123, %p124
      %p126 = scmp.ne.s32.totalorder %s118, %s120
      %p127 = scmp.eq.s32.totalorder %s26, 1
      %p128 = por %p126, %p127
      %p129 = scmp.ne.s32.totalorder %s120, %s121
      %p130 = scmp.eq.s32.totalorder %s26, 0
      %p131 = por %p129, %p130
      %p132 = scmp.ne.s32.totalorder %s120, %s121
      %p133 = scmp.eq.s32.totalorder %s27, 1
      %p134 = por %p132, %p133
      %p136 = scmp.ne.s32.totalorder %s121, %s135
      %p137 = scmp.eq.s32.totalorder %s27, 0
      %p138 = por %p136, %p137
      %s140 = sadd.s32 %s139, 1
      %p143 = scmp.eq.s32.totalorder %s21, 1
      %p144 = scmp.ne.s32.totalorder %s139, %s141
      %p145 = scmp.eq.s32.totalorder %s21, 0
      %p146 = por %p144, %p145
      %p147 = scmp.ne.s32.totalorder %s139, %s141
      %p148 = scmp.eq.s32.totalorder %s26, 1
      %p149 = por %p147, %p148
      %p150 = scmp.ne.s32.totalorder %s141, %s142
      %p151 = scmp.eq.s32.totalorder %s26, 0
      %p152 = por %p150, %p151
      %p153 = scmp.ne.s32.totalorder %s141, %s142
      %p154 = scmp.eq.s32.totalorder %s27, 1
      %p155 = por %p153, %p154
      %p157 = scmp.ne.s32.totalorder %s142, %s156
      %p158 = scmp.eq.s32.totalorder %s27, 0
      %p159 = por %p157, %p158
      %s161 = sadd.s32 %s160, 1
      %p164 = scmp.eq.s32.totalorder %s21, 1
      %p165 = scmp.ne.s32.totalorder %s160, %s162
      %p166 = scmp.eq.s32.totalorder %s21, 0
      %p167 = por %p165, %p166
      %p168 = scmp.ne.s32.totalorder %s160, %s162
      %p169 = scmp.eq.s32.totalorder %s26, 1
      %p170 = por %p168, %p169
      %p171 = scmp.ne.s32.totalorder %s162, %s163
      %p172 = scmp.eq.s32.totalorder %s26, 0
      %p173 = por %p171, %p172
      %p174 = scmp.ne.s32.totalorder %s162, %s163
      %p175 = scmp.eq.s32.totalorder %s27, 1
      %p176 = por %p174, %p175
      %p178 = scmp.ne.s32.totalorder %s163, %s177
      %p179 = scmp.eq.s32.totalorder %s27, 0
      %p180 = por %p178, %p179
      %s181 = ssub.s32 %s21, %s28
      %p182 = scmp.eq.s32.totalorder %s181, 0
      %s184 = sadd.s32 %s183, 1
      %s185 = scalar_select %p182, %s183, %s184
      %p188 = pneg %p182
      %p189 = scmp.eq.s32.totalorder %s21, 1
      %p190 = por %p188, %p189
      %p191 = scmp.ne.s32.totalorder %s183, %s186
      %p192 = scmp.eq.s32.totalorder %s21, 0
      %p193 = por %p191, %p192
      %p194 = scmp.ne.s32.totalorder %s183, %s186
      %p195 = scmp.eq.s32.totalorder %s26, 1
      %p196 = por %p194, %p195
      %p197 = scmp.ne.s32.totalorder %s186, %s187
      %p198 = scmp.eq.s32.totalorder %s26, 0
      %p199 = por %p197, %p198
      %p200 = scmp.ne.s32.totalorder %s186, %s187
      %p201 = scmp.eq.s32.totalorder %s27, 1
      %p202 = por %p200, %p201
      %p204 = scmp.ne.s32.totalorder %s187, %s203
      %p205 = scmp.eq.s32.totalorder %s27, 0
      %p206 = por %p204, %p205
      %p207 = scmp.le.s32.totalorder 1, %s21
      %p208 = scmp.lt.s32.totalorder %s21, 3
      %p209 = pnand %p207, %p208
      %p210 = pneg %p209
      // Predicated region
      $region9: #{tpu_custom_call.1} parent=5 // pred_check
        _
      $region10: #{tpu_custom_call.1} parent=5 // pred_check_branch
        %212 = sbr.rel (%p209) target = $region12
      $region11: #{tpu_custom_call.1} parent=5 // pred_region
        %s213 = ssub.s32 %s21, 1
        // Predicated region
        $region13: #{tpu_custom_call.1} parent=11 // pred_check
          %p214 = pneg %p68
        $region14: #{tpu_custom_call.1} parent=11 // pred_check_branch
          %216 = sbr.rel (%p214) target = $region16
        $region15: #{tpu_custom_call.1} parent=11 // pred_region
          %s218 = ssub.s32 1024, 1024
          %219 = vsyncadd [#allocation6], %s218
          %s220 = sshll.u32 [#allocation5], 4
          %s221 = int_to_ptr.vmem [resolvable:$true] %s220
          %226 = dma.hbm_to_vmem [thread:$0]  %s1, 1024, %s221, [#allocation6], 64, 64, 4
        $region16: #{tpu_custom_call.1} parent=11 // pred_fallthru
          _
        // Predicated region
        $region17: #{tpu_custom_call.1} parent=11 // pred_check
          %p227 = pneg %p89
        $region18: #{tpu_custom_call.1} parent=11 // pred_check_branch
          %229 = sbr.rel (%p227) target = $region20
        $region19: #{tpu_custom_call.1} parent=11 // pred_region
          _
        $region20: #{tpu_custom_call.1} parent=11 // pred_fallthru
          _
        // Predicated region
        $region21: #{tpu_custom_call.1} parent=11 // pred_check
          %p230 = pneg %p110
        $region22: #{tpu_custom_call.1} parent=11 // pred_check_branch
          %232 = sbr.rel (%p230) target = $region24
        $region23: #{tpu_custom_call.1} parent=11 // pred_region
          %s234 = ssub.s32 1024, 1024
          %235 = vsyncadd [#allocation6], %s234
          %s236 = sshll.u32 [#allocation7], 4
          %s237 = int_to_ptr.vmem [resolvable:$true] %s236
          %242 = dma.hbm_to_vmem [thread:$0]  %s3, 1024, %s237, [#allocation6], 64, 64, 4
        $region24: #{tpu_custom_call.1} parent=11 // pred_fallthru
          _
        // Predicated region
        $region25: #{tpu_custom_call.1} parent=11 // pred_check
          %p243 = pneg %p131
        $region26: #{tpu_custom_call.1} parent=11 // pred_check_branch
          %245 = sbr.rel (%p243) target = $region28
        $region27: #{tpu_custom_call.1} parent=11 // pred_region
          _
        $region28: #{tpu_custom_call.1} parent=11 // pred_fallthru
          _
        // Predicated region
        $region29: #{tpu_custom_call.1} parent=11 // pred_check
          %p246 = pneg %p152
        $region30: #{tpu_custom_call.1} parent=11 // pred_check_branch
          %248 = sbr.rel (%p246) target = $region32
        $region31: #{tpu_custom_call.1} parent=11 // pred_region
          %s250 = ssub.s32 1024, 1024
          %251 = vsyncadd [#allocation9], %s250
          %s252 = sshll.u32 [#allocation8], 4
          %s253 = int_to_ptr.vmem [resolvable:$true] %s252
          %258 = dma.hbm_to_vmem [thread:$0]  %s5, 1024, %s253, [#allocation9], 64, 64, 4
        $region32: #{tpu_custom_call.1} parent=11 // pred_fallthru
          _
        // Predicated region
        $region33: #{tpu_custom_call.1} parent=11 // pred_check
          %p259 = pneg %p173
        $region34: #{tpu_custom_call.1} parent=11 // pred_check_branch
          %261 = sbr.rel (%p259) target = $region36
        $region35: #{tpu_custom_call.1} parent=11 // pred_region
          _
        $region36: #{tpu_custom_call.1} parent=11 // pred_fallthru
          _
      $region12: #{tpu_custom_call.1} parent=5 // pred_fallthru
        _
      %p262 = scmp.lt.s32.totalorder %s21, 2
      // Predicated region
      $region37: #{tpu_custom_call.1} parent=5 // pred_check
        %p263 = pneg %p262
      $region38: #{tpu_custom_call.1} parent=5 // pred_check_branch
        %265 = sbr.rel (%p263) target = $region40
      $region39: #{tpu_custom_call.1} parent=5 // pred_region
        // Predicated region
        $region41: #{tpu_custom_call.1} parent=39 // pred_check
          %p266 = pneg %p41
        $region42: #{tpu_custom_call.1} parent=39 // pred_check_branch
          %268 = sbr.rel (%p266) target = $region44
        $region43: #{tpu_custom_call.1} parent=39 // pred_region
          %s269 = sand.u32 %s31, 1
          %s270 = scalar_lea.sflag [#allocation3], %s269
          %s271 = sand.u32 %s31, 1
          %s272 = smul.addr %s271, 64
          %s273 = scalar_lea.vmem [#allocation2], %s272
          %s274 = smul.u32 8, %s21
          %s276 = ssub.s32 1024, 1024
          %277 = vsyncadd %s270, %s276
          %s278 = smul.addr %s274, 128
          %s279 = scalar_lea.hbm %s0, %s278
          %s280 = sshll.u32 %s273, 4
          %s281 = int_to_ptr.vmem [resolvable:$true] %s280
          %286 = dma.hbm_to_vmem [thread:$0]  %s279, 1024, %s281, %s270, 128, 128, 8
        $region44: #{tpu_custom_call.1} parent=39 // pred_fallthru
          _
      $region40: #{tpu_custom_call.1} parent=5 // pred_fallthru
        _
      %p287 = scmp.le.s32.totalorder 1, %s21
      %p288 = scmp.lt.s32.totalorder %s21, 3
      %p289 = pnand %p287, %p288
      %p290 = pneg %p289
      // Predicated region
      $region45: #{tpu_custom_call.1} parent=5 // pred_check
        _
      $region46: #{tpu_custom_call.1} parent=5 // pred_check_branch
        %292 = sbr.rel (%p289) target = $region48
      $region47: #{tpu_custom_call.1} parent=5 // pred_region
        %s293 = ssub.s32 %s21, 1
        %s294 = sand.u32 %s34, 1
        %s295 = scalar_lea.sflag [#allocation3], %s294
        %s296 = sand.u32 %s34, 1
        %s297 = smul.addr %s296, 64
        %s298 = scalar_lea.vmem [#allocation2], %s297
        // Predicated region
        $region49: #{tpu_custom_call.1} parent=47 // pred_check
          %p299 = pneg %p47
        $region50: #{tpu_custom_call.1} parent=47 // pred_check_branch
          %301 = sbr.rel (%p299) target = $region52
        $region51: #{tpu_custom_call.1} parent=47 // pred_region
          %302 = dma.done %s295, 1024
        $region52: #{tpu_custom_call.1} parent=47 // pred_fallthru
          _
        // Predicated region
        $region53: #{tpu_custom_call.1} parent=47 // pred_check
          %p303 = pneg %p68
        $region54: #{tpu_custom_call.1} parent=47 // pred_check_branch
          %305 = sbr.rel (%p303) target = $region56
        $region55: #{tpu_custom_call.1} parent=47 // pred_region
          %306 = dma.done [#allocation6], 1024
        $region56: #{tpu_custom_call.1} parent=47 // pred_fallthru
          _
        // Predicated region
        $region57: #{tpu_custom_call.1} parent=47 // pred_check
          %p307 = pneg %p110
        $region58: #{tpu_custom_call.1} parent=47 // pred_check_branch
          %309 = sbr.rel (%p307) target = $region60
        $region59: #{tpu_custom_call.1} parent=47 // pred_region
          %310 = dma.done [#allocation6], 1024
        $region60: #{tpu_custom_call.1} parent=47 // pred_fallthru
          _
        // Predicated region
        $region61: #{tpu_custom_call.1} parent=47 // pred_check
          %p311 = pneg %p152
        $region62: #{tpu_custom_call.1} parent=47 // pred_check_branch
          %313 = sbr.rel (%p311) target = $region64
        $region63: #{tpu_custom_call.1} parent=47 // pred_region
          %314 = dma.done [#allocation9], 1024
        $region64: #{tpu_custom_call.1} parent=47 // pred_fallthru
          _
        %s315 = sand.u32 %s34, 1
        %s316 = scalar_lea.sflag [#allocation3], %s315
        %s317 = sand.u32 %s34, 1
        %s318 = smul.addr %s317, 64
        %s319 = scalar_lea.vmem [#allocation2], %s318
        %p320 = pneg %p47
        %p321 = pneg %p44
        %p322 = pneg %p68
        %p323 = pneg %p65
        %p324 = pneg %p89
        %p325 = pneg %p86
        %p326 = pneg %p110
        %p327 = pneg %p107
        %p328 = pneg %p131
        %p329 = pneg %p128
        %p330 = pneg %p152
        %p331 = pneg %p149
        %p332 = pneg %p173
        %p333 = pneg %p170
        %p334 = pneg %p199
        %p335 = pneg %p196
        %s336 = sand.u32 %s186, 1
        %s337 = scalar_lea.sflag [#allocation4], %s336
        %s338 = sand.u32 %s186, 1
        %s339 = smul.addr %s338, 64
        %s340 = scalar_lea.vmem [#allocation10], %s339
        %s341 = smul.u32 8, %s26
        %s342 = smul.u32 8, %s26
        %v344 = vld [vmem:[%s298] sm:$0xff]
        %v345 = vld [vmem:[%s298 + $0x8] sm:$0xff]
        %v346 = vld [vmem:[%s298 + $0x10] sm:$0xff]
        %v347 = vld [vmem:[%s298 + $0x18] sm:$0xff]
        %v348 = vld [vmem:[%s298 + $0x20] sm:$0xff]
        %v349 = vld [vmem:[%s298 + $0x28] sm:$0xff]
        %v350 = vld [vmem:[%s298 + $0x30] sm:$0xff]
        %v351 = vld [vmem:[%s298 + $0x38] sm:$0xff]
        %v352 = vld [vmem:[#allocation5] sm:$0xf]
        %v353 = vld [vmem:[#allocation5 + $0x4] sm:$0xf]
        %v354 = vld [vmem:[#allocation5 + $0x8] sm:$0xf]
        %v355 = vld [vmem:[#allocation5 + $0xc] sm:$0xf]
        %v356 = vld [vmem:[#allocation5 + $0x10] sm:$0xf]
        %v357 = vld [vmem:[#allocation5 + $0x14] sm:$0xf]
        %v358 = vld [vmem:[#allocation5 + $0x18] sm:$0xf]
        %v359 = vld [vmem:[#allocation5 + $0x1c] sm:$0xf]
        %v360 = vld [vmem:[#allocation5 + $0x20] sm:$0xf]
        %v361 = vld [vmem:[#allocation5 + $0x24] sm:$0xf]
        %v362 = vld [vmem:[#allocation5 + $0x28] sm:$0xf]
        %v363 = vld [vmem:[#allocation5 + $0x2c] sm:$0xf]
        %v364 = vld [vmem:[#allocation5 + $0x30] sm:$0xf]
        %v365 = vld [vmem:[#allocation5 + $0x34] sm:$0xf]
        %v366 = vld [vmem:[#allocation5 + $0x38] sm:$0xf]
        %v367 = vld [vmem:[#allocation5 + $0x3c] sm:$0xf]
        %v368 = vld [vmem:[%s2] sm:$0x1]
        %v369 = vpack.c.bf16 %v345, %v344
        %v370 = vpack.c.bf16 %v347, %v346
        %v371 = vpack.c.bf16 %v349, %v348
        %v372 = vpack.c.bf16 %v351, %v350
        %v374 = vlaneseq
        %v375 = vshrl.u32 %v374, 7
        %v376 = vsub.s32 0, %v375
        %v377 = vrot.slane %v368, %v376
        %v395 = vunpack.c.l.b16 %v352
        %v396 = vunpack.c.l.b16 %v353
        %v397 = vunpack.c.l.b16 %v354
        %v398 = vunpack.c.l.b16 %v355
        %v399 = vunpack.c.l.b16 %v356
        %v400 = vunpack.c.l.b16 %v357
        %v401 = vunpack.c.l.b16 %v358
        %v402 = vunpack.c.l.b16 %v359
        %v403 = vunpack.c.l.b16 %v360
        %v404 = vunpack.c.l.b16 %v361
        %v405 = vunpack.c.l.b16 %v362
        %v406 = vunpack.c.l.b16 %v363
        %v407 = vunpack.c.l.b16 %v364
        %v408 = vunpack.c.l.b16 %v365
        %v409 = vunpack.c.l.b16 %v366
        %v410 = vunpack.c.l.b16 %v367
        %v411 = vpack.c.b16 %v396, %v395
        %v412 = vpack.c.b16 %v398, %v397
        %v413 = vpack.c.b16 %v400, %v399
        %v414 = vpack.c.b16 %v402, %v401
        %v415 = vpack.c.b16 %v404, %v403
        %v416 = vpack.c.b16 %v406, %v405
        %v417 = vpack.c.b16 %v408, %v407
        %v418 = vpack.c.b16 %v410, %v409
        %427 = vmatprep.subr.bf16.mxu0 0
        %428 = vmatpush1.bf16.msra.mxu0 %v418
        %429 = vmatprep.subr.bf16.mxu0 0
        %430 = vmatpush1.bf16.msra.mxu0 %v417
        %431 = vmatprep.subr.bf16.mxu0 0
        %432 = vmatpush1.bf16.msra.mxu0 %v416
        %433 = vmatprep.subr.bf16.mxu0 0
        %434 = vmatpush1.bf16.msra.mxu0 %v415
        %435 = vmatprep.subr.bf16.mxu0 0
        %436 = vmatpush1.bf16.msra.mxu0 %v414
        %437 = vmatprep.subr.bf16.mxu0 0
        %438 = vmatpush1.bf16.msra.mxu0 %v413
        %439 = vmatprep.subr.bf16.mxu0 0
        %440 = vmatpush1.bf16.msra.mxu0 %v412
        %441 = vmatprep.subr.bf16.mxu0 0
        %442 = vmatpush1.bf16.msra.mxu0 %v411
        %443 = vmatprep.subr.bf16.mxu0 0
        %444 = vmatpush2.bf16.msra.mxu0 0
        %445 = vmatprep.subr.bf16.mxu0 0
        %446 = vmatpush2.bf16.msra.mxu0 0
        %447 = vmatprep.subr.bf16.mxu0 0
        %448 = vmatpush2.bf16.msra.mxu0 0
        %449 = vmatprep.subr.bf16.mxu0 0
        %450 = vmatpush2.bf16.msra.mxu0 0
        %451 = vmatprep.subr.bf16.mxu0 0
        %452 = vmatpush2.bf16.msra.mxu0 0
        %453 = vmatprep.subr.bf16.mxu0 0
        %454 = vmatpush2.bf16.msra.mxu0 0
        %455 = vmatprep.subr.bf16.mxu0 0
        %456 = vmatpush2.bf16.msra.mxu0 0
        %457 = vmatprep.subr.bf16.mxu0 0
        %458 = vmatpush2.bf16.msra.mxu0 0
        %459 = vmatprep.mubr.bf16.mxu0 0
        %460 = vmatmul.mubr.bf16.gmra.mxu0 %v369
        %v461 = vpop.f32.mrf.mxu0
        %v462 = vadd.f32 %v377, %v461
        %v463 = vpop.f32.mrf.mxu0
        %v464 = vpop.f32.mrf.mxu0
        %v465 = vadd.f32 %v377, %v464
        %v466 = vpop.f32.mrf.mxu0
        %467 = vmatprep.mubr.bf16.mxu0 0
        %468 = vmatmul.mubr.bf16.gmra.mxu0 %v370
        %v469 = vpop.f32.mrf.mxu0
        %v470 = vadd.f32 %v377, %v469
        %v471 = vpop.f32.mrf.mxu0
        %v472 = vpop.f32.mrf.mxu0
        %v473 = vadd.f32 %v377, %v472
        %v474 = vpop.f32.mrf.mxu0
        %475 = vmatprep.mubr.bf16.mxu0 0
        %476 = vmatmul.mubr.bf16.gmra.mxu0 %v371
        %v477 = vpop.f32.mrf.mxu0
        %v478 = vadd.f32 %v377, %v477
        %v479 = vpop.f32.mrf.mxu0
        %v480 = vpop.f32.mrf.mxu0
        %v481 = vadd.f32 %v377, %v480
        %v482 = vpop.f32.mrf.mxu0
        %483 = vmatprep.mubr.bf16.mxu0 0
        %484 = vmatmul.mubr.bf16.gmra.mxu0 %v372
        %v485 = vpop.f32.mrf.mxu0
        %v486 = vadd.f32 %v377, %v485
        %v487 = vpop.f32.mrf.mxu0
        %v488 = vpop.f32.mrf.mxu0
        %v489 = vadd.f32 %v377, %v488
        %v490 = vpop.f32.mrf.mxu0
        %491 = vdwg.mxu0
        %v492 = vmax.f32 %v462, 0.0
        %v493 = vmax.f32 %v465, 0.0
        %v494 = vmax.f32 %v470, 0.0
        %v495 = vmax.f32 %v473, 0.0
        %v496 = vmax.f32 %v478, 0.0
        %v497 = vmax.f32 %v481, 0.0
        %v498 = vmax.f32 %v486, 0.0
        %v499 = vmax.f32 %v489, 0.0
        %v500 = vld [vmem:[#allocation7] sm:$0xf]
        %v501 = vld [vmem:[#allocation7 + $0x4] sm:$0xf]
        %v502 = vld [vmem:[#allocation7 + $0x8] sm:$0xf]
        %v503 = vld [vmem:[#allocation7 + $0xc] sm:$0xf]
        %v504 = vld [vmem:[#allocation7 + $0x10] sm:$0xf]
        %v505 = vld [vmem:[#allocation7 + $0x14] sm:$0xf]
        %v506 = vld [vmem:[#allocation7 + $0x18] sm:$0xf]
        %v507 = vld [vmem:[#allocation7 + $0x1c] sm:$0xf]
        %v508 = vld [vmem:[#allocation7 + $0x20] sm:$0xf]
        %v509 = vld [vmem:[#allocation7 + $0x24] sm:$0xf]
        %v510 = vld [vmem:[#allocation7 + $0x28] sm:$0xf]
        %v511 = vld [vmem:[#allocation7 + $0x2c] sm:$0xf]
        %v512 = vld [vmem:[#allocation7 + $0x30] sm:$0xf]
        %v513 = vld [vmem:[#allocation7 + $0x34] sm:$0xf]
        %v514 = vld [vmem:[#allocation7 + $0x38] sm:$0xf]
        %v515 = vld [vmem:[#allocation7 + $0x3c] sm:$0xf]
        %v516 = vld [vmem:[%s4] sm:$0x1]
        %v517 = vpack.c.bf16 %v493, %v492
        %v518 = vpack.c.bf16 %v495, %v494
        %v519 = vpack.c.bf16 %v497, %v496
        %v520 = vpack.c.bf16 %v499, %v498
        %v522 = vlaneseq
        %v523 = vshrl.u32 %v522, 7
        %v524 = vsub.s32 0, %v523
        %v525 = vrot.slane %v516, %v524
        %v543 = vunpack.c.l.b16 %v500
        %v544 = vunpack.c.l.b16 %v501
        %v545 = vunpack.c.l.b16 %v502
        %v546 = vunpack.c.l.b16 %v503
        %v547 = vunpack.c.l.b16 %v504
        %v548 = vunpack.c.l.b16 %v505
        %v549 = vunpack.c.l.b16 %v506
        %v550 = vunpack.c.l.b16 %v507
        %v551 = vunpack.c.l.b16 %v508
        %v552 = vunpack.c.l.b16 %v509
        %v553 = vunpack.c.l.b16 %v510
        %v554 = vunpack.c.l.b16 %v511
        %v555 = vunpack.c.l.b16 %v512
        %v556 = vunpack.c.l.b16 %v513
        %v557 = vunpack.c.l.b16 %v514
        %v558 = vunpack.c.l.b16 %v515
        %v559 = vpack.c.b16 %v544, %v543
        %v560 = vpack.c.b16 %v546, %v545
        %v561 = vpack.c.b16 %v548, %v547
        %v562 = vpack.c.b16 %v550, %v549
        %v563 = vpack.c.b16 %v552, %v551
        %v564 = vpack.c.b16 %v554, %v553
        %v565 = vpack.c.b16 %v556, %v555
        %v566 = vpack.c.b16 %v558, %v557
        %575 = vmatprep.subr.bf16.mxu0 0
        %576 = vmatpush1.bf16.msra.mxu0 %v566
        %577 = vmatprep.subr.bf16.mxu0 0
        %578 = vmatpush1.bf16.msra.mxu0 %v565
        %579 = vmatprep.subr.bf16.mxu0 0
        %580 = vmatpush1.bf16.msra.mxu0 %v564
        %581 = vmatprep.subr.bf16.mxu0 0
        %582 = vmatpush1.bf16.msra.mxu0 %v563
        %583 = vmatprep.subr.bf16.mxu0 0
        %584 = vmatpush1.bf16.msra.mxu0 %v562
        %585 = vmatprep.subr.bf16.mxu0 0
        %586 = vmatpush1.bf16.msra.mxu0 %v561
        %587 = vmatprep.subr.bf16.mxu0 0
        %588 = vmatpush1.bf16.msra.mxu0 %v560
        %589 = vmatprep.subr.bf16.mxu0 0
        %590 = vmatpush1.bf16.msra.mxu0 %v559
        %591 = vmatprep.subr.bf16.mxu0 0
        %592 = vmatpush2.bf16.msra.mxu0 0
        %593 = vmatprep.subr.bf16.mxu0 0
        %594 = vmatpush2.bf16.msra.mxu0 0
        %595 = vmatprep.subr.bf16.mxu0 0
        %596 = vmatpush2.bf16.msra.mxu0 0
        %597 = vmatprep.subr.bf16.mxu0 0
        %598 = vmatpush2.bf16.msra.mxu0 0
        %599 = vmatprep.subr.bf16.mxu0 0
        %600 = vmatpush2.bf16.msra.mxu0 0
        %601 = vmatprep.subr.bf16.mxu0 0
        %602 = vmatpush2.bf16.msra.mxu0 0
        %603 = vmatprep.subr.bf16.mxu0 0
        %604 = vmatpush2.bf16.msra.mxu0 0
        %605 = vmatprep.subr.bf16.mxu0 0
        %606 = vmatpush2.bf16.msra.mxu0 0
        %607 = vmatprep.mubr.bf16.mxu0 0
        %608 = vmatmul.mubr.bf16.gmra.mxu0 %v517
        %v609 = vpop.f32.mrf.mxu0
        %v610 = vadd.f32 %v525, %v609
        %v611 = vpop.f32.mrf.mxu0
        %v612 = vpop.f32.mrf.mxu0
        %v613 = vadd.f32 %v525, %v612
        %v614 = vpop.f32.mrf.mxu0
        %615 = vmatprep.mubr.bf16.mxu0 0
        %616 = vmatmul.mubr.bf16.gmra.mxu0 %v518
        %v617 = vpop.f32.mrf.mxu0
        %v618 = vadd.f32 %v525, %v617
        %v619 = vpop.f32.mrf.mxu0
        %v620 = vpop.f32.mrf.mxu0
        %v621 = vadd.f32 %v525, %v620
        %v622 = vpop.f32.mrf.mxu0
        %623 = vmatprep.mubr.bf16.mxu0 0
        %624 = vmatmul.mubr.bf16.gmra.mxu0 %v519
        %v625 = vpop.f32.mrf.mxu0
        %v626 = vadd.f32 %v525, %v625
        %v627 = vpop.f32.mrf.mxu0
        %v628 = vpop.f32.mrf.mxu0
        %v629 = vadd.f32 %v525, %v628
        %v630 = vpop.f32.mrf.mxu0
        %631 = vmatprep.mubr.bf16.mxu0 0
        %632 = vmatmul.mubr.bf16.gmra.mxu0 %v520
        %v633 = vpop.f32.mrf.mxu0
        %v634 = vadd.f32 %v525, %v633
        %v635 = vpop.f32.mrf.mxu0
        %v636 = vpop.f32.mrf.mxu0
        %v637 = vadd.f32 %v525, %v636
        %v638 = vpop.f32.mrf.mxu0
        %639 = vdwg.mxu0
        %v640 = vmax.f32 %v610, 0.0
        %v641 = vmax.f32 %v613, 0.0
        %v642 = vmax.f32 %v618, 0.0
        %v643 = vmax.f32 %v621, 0.0
        %v644 = vmax.f32 %v626, 0.0
        %v645 = vmax.f32 %v629, 0.0
        %v646 = vmax.f32 %v634, 0.0
        %v647 = vmax.f32 %v637, 0.0
        %v648 = vld [vmem:[#allocation8] sm:$0xf]
        %v649 = vld [vmem:[#allocation8 + $0x4] sm:$0xf]
        %v650 = vld [vmem:[#allocation8 + $0x8] sm:$0xf]
        %v651 = vld [vmem:[#allocation8 + $0xc] sm:$0xf]
        %v652 = vld [vmem:[#allocation8 + $0x10] sm:$0xf]
        %v653 = vld [vmem:[#allocation8 + $0x14] sm:$0xf]
        %v654 = vld [vmem:[#allocation8 + $0x18] sm:$0xf]
        %v655 = vld [vmem:[#allocation8 + $0x1c] sm:$0xf]
        %v656 = vld [vmem:[#allocation8 + $0x20] sm:$0xf]
        %v657 = vld [vmem:[#allocation8 + $0x24] sm:$0xf]
        %v658 = vld [vmem:[#allocation8 + $0x28] sm:$0xf]
        %v659 = vld [vmem:[#allocation8 + $0x2c] sm:$0xf]
        %v660 = vld [vmem:[#allocation8 + $0x30] sm:$0xf]
        %v661 = vld [vmem:[#allocation8 + $0x34] sm:$0xf]
        %v662 = vld [vmem:[#allocation8 + $0x38] sm:$0xf]
        %v663 = vld [vmem:[#allocation8 + $0x3c] sm:$0xf]
        %v664 = vld [vmem:[%s6] sm:$0x1]
        %v665 = vpack.c.bf16 %v641, %v640
        %v666 = vpack.c.bf16 %v643, %v642
        %v667 = vpack.c.bf16 %v645, %v644
        %v668 = vpack.c.bf16 %v647, %v646
        %v670 = vlaneseq
        %v671 = vshrl.u32 %v670, 7
        %v672 = vsub.s32 0, %v671
        %v673 = vrot.slane %v664, %v672
        %v691 = vunpack.c.l.b16 %v648
        %v692 = vunpack.c.l.b16 %v649
        %v693 = vunpack.c.l.b16 %v650
        %v694 = vunpack.c.l.b16 %v651
        %v695 = vunpack.c.l.b16 %v652
        %v696 = vunpack.c.l.b16 %v653
        %v697 = vunpack.c.l.b16 %v654
        %v698 = vunpack.c.l.b16 %v655
        %v699 = vunpack.c.l.b16 %v656
        %v700 = vunpack.c.l.b16 %v657
        %v701 = vunpack.c.l.b16 %v658
        %v702 = vunpack.c.l.b16 %v659
        %v703 = vunpack.c.l.b16 %v660
        %v704 = vunpack.c.l.b16 %v661
        %v705 = vunpack.c.l.b16 %v662
        %v706 = vunpack.c.l.b16 %v663
        %v707 = vpack.c.b16 %v692, %v691
        %v708 = vpack.c.b16 %v694, %v693
        %v709 = vpack.c.b16 %v696, %v695
        %v710 = vpack.c.b16 %v698, %v697
        %v711 = vpack.c.b16 %v700, %v699
        %v712 = vpack.c.b16 %v702, %v701
        %v713 = vpack.c.b16 %v704, %v703
        %v714 = vpack.c.b16 %v706, %v705
        %723 = vmatprep.subr.bf16.mxu0 0
        %724 = vmatpush1.bf16.msra.mxu0 %v714
        %725 = vmatprep.subr.bf16.mxu0 0
        %726 = vmatpush1.bf16.msra.mxu0 %v713
        %727 = vmatprep.subr.bf16.mxu0 0
        %728 = vmatpush1.bf16.msra.mxu0 %v712
        %729 = vmatprep.subr.bf16.mxu0 0
        %730 = vmatpush1.bf16.msra.mxu0 %v711
        %731 = vmatprep.subr.bf16.mxu0 0
        %732 = vmatpush1.bf16.msra.mxu0 %v710
        %733 = vmatprep.subr.bf16.mxu0 0
        %734 = vmatpush1.bf16.msra.mxu0 %v709
        %735 = vmatprep.subr.bf16.mxu0 0
        %736 = vmatpush1.bf16.msra.mxu0 %v708
        %737 = vmatprep.subr.bf16.mxu0 0
        %738 = vmatpush1.bf16.msra.mxu0 %v707
        %739 = vmatprep.subr.bf16.mxu0 0
        %740 = vmatpush2.bf16.msra.mxu0 0
        %741 = vmatprep.subr.bf16.mxu0 0
        %742 = vmatpush2.bf16.msra.mxu0 0
        %743 = vmatprep.subr.bf16.mxu0 0
        %744 = vmatpush2.bf16.msra.mxu0 0
        %745 = vmatprep.subr.bf16.mxu0 0
        %746 = vmatpush2.bf16.msra.mxu0 0
        %747 = vmatprep.subr.bf16.mxu0 0
        %748 = vmatpush2.bf16.msra.mxu0 0
        %749 = vmatprep.subr.bf16.mxu0 0
        %750 = vmatpush2.bf16.msra.mxu0 0
        %751 = vmatprep.subr.bf16.mxu0 0
        %752 = vmatpush2.bf16.msra.mxu0 0
        %753 = vmatprep.subr.bf16.mxu0 0
        %754 = vmatpush2.bf16.msra.mxu0 0
        %755 = vmatprep.mubr.bf16.mxu0 0
        %756 = vmatmul.mubr.bf16.gmra.mxu0 %v665
        %v757 = vpop.f32.mrf.mxu0
        %v758 = vadd.f32 %v673, %v757
        %v759 = vpop.f32.mrf.mxu0
        %v760 = vpop.f32.mrf.mxu0
        %v761 = vadd.f32 %v673, %v760
        %v762 = vpop.f32.mrf.mxu0
        %763 = vmatprep.mubr.bf16.mxu0 0
        %764 = vmatmul.mubr.bf16.gmra.mxu0 %v666
        %v765 = vpop.f32.mrf.mxu0
        %v766 = vadd.f32 %v673, %v765
        %v767 = vpop.f32.mrf.mxu0
        %v768 = vpop.f32.mrf.mxu0
        %v769 = vadd.f32 %v673, %v768
        %v770 = vpop.f32.mrf.mxu0
        %771 = vmatprep.mubr.bf16.mxu0 0
        %772 = vmatmul.mubr.bf16.gmra.mxu0 %v667
        %v773 = vpop.f32.mrf.mxu0
        %v774 = vadd.f32 %v673, %v773
        %v775 = vpop.f32.mrf.mxu0
        %v776 = vpop.f32.mrf.mxu0
        %v777 = vadd.f32 %v673, %v776
        %v778 = vpop.f32.mrf.mxu0
        %779 = vmatprep.mubr.bf16.mxu0 0
        %780 = vmatmul.mubr.bf16.gmra.mxu0 %v668
        %v781 = vpop.f32.mrf.mxu0
        %v782 = vadd.f32 %v673, %v781
        %v783 = vpop.f32.mrf.mxu0
        %v784 = vpop.f32.mrf.mxu0
        %v785 = vadd.f32 %v673, %v784
        %v786 = vpop.f32.mrf.mxu0
        %787 = vdwg.mxu0
        %788 = vst [vmem:[%s340] sm:$0xff] %v758
        %789 = vst [vmem:[%s340 + $0x8] sm:$0xff] %v761
        %790 = vst [vmem:[%s340 + $0x10] sm:$0xff] %v766
        %791 = vst [vmem:[%s340 + $0x18] sm:$0xff] %v769
        %792 = vst [vmem:[%s340 + $0x20] sm:$0xff] %v774
        %793 = vst [vmem:[%s340 + $0x28] sm:$0xff] %v777
        %794 = vst [vmem:[%s340 + $0x30] sm:$0xff] %v782
        %795 = vst [vmem:[%s340 + $0x38] sm:$0xff] %v785
        %s796 = sand.u32 %s186, 1
        %s797 = scalar_lea.sflag [#allocation4], %s796
        %s798 = sand.u32 %s186, 1
        %s799 = smul.addr %s798, 64
        %s800 = scalar_lea.vmem [#allocation10], %s799
        // Predicated region
        $region65: #{tpu_custom_call.1} parent=47 // pred_check
          %p801 = pneg %p196
        $region66: #{tpu_custom_call.1} parent=47 // pred_check_branch
          %803 = sbr.rel (%p801) target = $region68
        $region67: #{tpu_custom_call.1} parent=47 // pred_region
          %s804 = smul.u32 8, %s26
          %s806 = ssub.s32 1024, 1024
          %807 = vsyncadd %s797, %s806
          %s808 = smul.addr %s804, 128
          %s809 = scalar_lea.hbm %s7, %s808
          %s810 = sshll.u32 %s800, 4
          %s811 = int_to_ptr.vmem [resolvable:$true] %s810
          %816 = dma.vmem_to_hbm [thread:$0]  %s811, 1024, %s809, %s797, 128, 128, 8
        $region68: #{tpu_custom_call.1} parent=47 // pred_fallthru
          _
      $region48: #{tpu_custom_call.1} parent=5 // pred_fallthru
        _
      %p817 = scmp.le.s32.totalorder 2, %s21
      // Predicated region
      $region69: #{tpu_custom_call.1} parent=5 // pred_check
        %p818 = pneg %p817
      $region70: #{tpu_custom_call.1} parent=5 // pred_check_branch
        %820 = sbr.rel (%p818) target = $region72
      $region71: #{tpu_custom_call.1} parent=5 // pred_region
        %s821 = ssub.s32 %s21, 2
        // Predicated region
        $region73: #{tpu_custom_call.1} parent=71 // pred_check
          %p822 = pneg %p202
        $region74: #{tpu_custom_call.1} parent=71 // pred_check_branch
          %824 = sbr.rel (%p822) target = $region76
        $region75: #{tpu_custom_call.1} parent=71 // pred_region
          %s825 = sand.u32 %s187, 1
          %s826 = scalar_lea.sflag [#allocation4], %s825
          %s827 = sand.u32 %s187, 1
          %s828 = smul.addr %s827, 64
          %s829 = scalar_lea.vmem [#allocation10], %s828
          %830 = dma.done %s826, 1024
        $region76: #{tpu_custom_call.1} parent=71 // pred_fallthru
          _
      $region72: #{tpu_custom_call.1} parent=5 // pred_fallthru
        _
    $region6: #{tpu_custom_call.1} parent=1 // loop_footer
      %s25 = sadd.s32 1, %s21
    $region7: #{tpu_custom_call.1} parent=1 // loop_footer_branch
      %20 = sbr.rel target = $region3
    $region8: #{tpu_custom_call.1} parent=1 // loop_exit
      _
    %831 = vsyncpa [#allocation3], 1
    %s832 = scalar_lea.sflag [#allocation3], 1
    %833 = vsyncpa %s832, 1
    %834 = vsyncpa [#allocation6], 1
    %835 = vsyncpa [#allocation9], 1
    %836 = vsyncpa [#allocation4], 1
    %s837 = scalar_lea.sflag [#allocation4], 1
    %838 = vsyncpa %s837, 1

</llo_original>
